<compile_context>
chip_gen: v7x
topology: tpu7x:2x2x1
jax: 0.10.0
libtpu: 0.0.40
codegen_flags: <defaults>
</compile_context>

<pallas_src>
import math
import functools

import jax
import jax.numpy as jnp
from jax.experimental import pallas as pl
from jax.experimental.pallas import tpu as pltpu

EPS = 1e-6

# problem sizes (toy, consistent with the module's forward)
B, S, D, H, D_FF = 2, 8, 32, 4, 64
DK = D // H


def _layer_norm(v, a, b):
    # PyTorch LayerNorm from the module: unbiased std (N-1), eps added to the
    # STD (not the variance), so keep sqrt + exact reciprocal (rsqrt(var+eps)
    # would change semantics slightly).
    mean = jnp.mean(v, axis=-1, keepdims=True)
    var = jnp.sum((v - mean) ** 2, axis=-1, keepdims=True) / (v.shape[-1] - 1)
    inv = pl.reciprocal(jnp.sqrt(var) + EPS, approx=False)
    return a * (v - mean) * inv + b


def encoder_layer_kernel(x_ref, kbias_ref, w_attn_ref, w_ff_ref, vec_ref,
                         out_ref, *, n_heads, d_k, d_model, d_ff):
    # Per grid step (= one batch element):
    #  x_ref:      (S, D)         activations for this batch element
    #  kbias_ref:  (1, S)         additive key-padding bias (0 keep / -1e9 drop)
    #  w_attn_ref: (D, 4*D)       [wq/sqrt(dk) | wk | wv | wo]  (128 lanes)
    #  w_ff_ref:   (D+D_FF, D_FF) rows 0:D = w1; rows D: = w2 (lanes 0:D valid)
    #  vec_ref:    (8, 3*D)       rows: ln1_a, ln1_b, ln2_a, ln2_b, bo, b2,
    #                             bqkv(=[bq/sqrt(dk)|bk|bv]), b1
    x = x_ref[...]                                              # (S, D)

    ln1_a = vec_ref[0:1, :d_model]
    ln1_b = vec_ref[1:2, :d_model]
    ln2_a = vec_ref[2:3, :d_model]
    ln2_b = vec_ref[3:4, :d_model]
    bo = vec_ref[4:5, :d_model]
    b2 = vec_ref[5:6, :d_model]
    bqkv = vec_ref[6:7, :]                                      # (1, 3D)
    b1 = vec_ref[7:8, :d_ff]                                    # (1, D_FF)

    # ---- sublayer 0: x + self_attn(norm(x)) -------------------------------
    n1 = _layer_norm(x, ln1_a, ln1_b)

    # Fused QKV projection: one (S,D)@(D,3D) matmul.  1/sqrt(d_k) is already
    # folded into wq/bq at pack time; columns are head-major per section.
    qkv = jnp.dot(n1, w_attn_ref[:, :3 * d_model],
                  preferred_element_type=jnp.float32) + bqkv    # (S, 3D)

    kbias = kbias_ref[...]                                      # (1, S)

    # Per-head attention via static lane slices (heads are lane-contiguous);
    # head contexts are concatenated back along lanes so the output projection
    # is a single matmul against wo.
    # NOTE: the additive -1e9 masking assumes every query row keeps >= 1 key,
    # which holds here because keys come from the query's own batch element.
    ctx_heads = []
    for h in range(n_heads):
        q_h = qkv[:, h * d_k:(h + 1) * d_k]                             # (S, DK)
        k_h = qkv[:, d_model + h * d_k:d_model + (h + 1) * d_k]         # (S, DK)
        v_h = qkv[:, 2 * d_model + h * d_k:2 * d_model + (h + 1) * d_k]  # (S, DK)

        s_h = jnp.einsum('qc,kc->qk', q_h, k_h,
                         preferred_element_type=jnp.float32) + kbias   # (S, S)
        m_h = jnp.max(s_h, axis=-1, keepdims=True)
        p_h = jnp.exp(s_h - m_h)
        # exact reciprocal: denominator is only S elements per head here, and
        # exact keeps parity with the PyTorch softmax (per correctness review)
        p_h = p_h * pl.reciprocal(jnp.sum(p_h, axis=-1, keepdims=True),
                                  approx=False)
        ctx_heads.append(jnp.dot(p_h, v_h,
                                 preferred_element_type=jnp.float32))   # (S, DK)

    ctx = jnp.concatenate(ctx_heads, axis=-1)                   # (S, D)
    attn = jnp.dot(ctx, w_attn_ref[:, 3 * d_model:],
                   preferred_element_type=jnp.float32) + bo
    x1 = x + attn                                               # dropout = identity (eval)

    # ---- sublayer 1: x + feed_forward(norm(x)) -----------------------------
    n2 = _layer_norm(x1, ln2_a, ln2_b)
    h1 = jnp.dot(n2, w_ff_ref[:d_model, :],
                 preferred_element_type=jnp.float32) + b1       # (S, D_FF)
    h1 = jnp.maximum(h1, 0.0)                                   # ReLU
    ff = jnp.dot(h1, w_ff_ref[d_model:, :d_model],
                 preferred_element_type=jnp.float32) + b2       # (S, D)

    out_ref[...] = x1 + ff


def pack_params(params):
    """One-time parameter packing (hoisted out of the per-call wrapper)."""
    inv_sqrt_dk = 1.0 / math.sqrt(DK)
    # [wq/sqrt(dk) | wk | wv | wo] -> (D, 4D) = (32, 128), lane-dense.
    w_attn = jnp.concatenate(
        [params["wq"] * inv_sqrt_dk, params["wk"], params["wv"], params["wo"]],
        axis=1).astype(jnp.float32)
    # [w1 ; w2 padded to D_FF lanes] -> (D + D_FF, D_FF) = (96, 64).
    w2_pad = jnp.zeros((D_FF, D_FF), jnp.float32).at[:, :D].set(params["w2"])
    w_ff = jnp.concatenate([params["w1"].astype(jnp.float32), w2_pad], axis=0)

    def row(v):
        return jnp.zeros((3 * D,), jnp.float32).at[:v.shape[0]].set(v)

    bqkv = jnp.concatenate(
        [params["bq"] * inv_sqrt_dk, params["bk"], params["bv"]])
    vec = jnp.stack([row(params["ln1_a"]), row(params["ln1_b"]),
                     row(params["ln2_a"]), row(params["ln2_b"]),
                     row(params["bo"]), row(params["b2"]),
                     row(bqkv), row(params["b1"])], axis=0)      # (8, 3D)
    return {"w_attn": w_attn, "w_ff": w_ff, "vec": vec}


@jax.jit
def encoder_layer(x, mask, packed):
    b, s, d = x.shape
    d_ff = packed["w_ff"].shape[1]
    n_heads = H
    d_k = d // n_heads

    # additive key-padding bias per batch element: 0 = keep, -1e9 = masked
    kbias = (mask.reshape(b, 1, s).astype(jnp.float32) - 1.0) * 1e9

    kernel = functools.partial(encoder_layer_kernel, n_heads=n_heads,
                               d_k=d_k, d_model=d, d_ff=d_ff)
    return pl.pallas_call(
        kernel,
        out_shape=jax.ShapeDtypeStruct((b, s, d), jnp.float32),
        grid=(b,),                                   # one batch element / step
        in_specs=[
            pl.BlockSpec((None, s, d), lambda i: (i, 0, 0)),        # x
            pl.BlockSpec((None, 1, s), lambda i: (i, 0, 0)),        # key bias
            pl.BlockSpec(packed["w_attn"].shape, lambda i: (0, 0)),  # resident
            pl.BlockSpec(packed["w_ff"].shape, lambda i: (0, 0)),    # resident
            pl.BlockSpec(packed["vec"].shape, lambda i: (0, 0)),     # resident
        ],
        out_specs=pl.BlockSpec((None, s, d), lambda i: (i, 0, 0)),
        compiler_params=pltpu.CompilerParams(
            dimension_semantics=("parallel",)),      # shards across TCs on v7x
    )(x, kbias, packed["w_attn"], packed["w_ff"], packed["vec"])


# ---------------------------- pure-JAX reference ----------------------------
def ref_encoder_layer(x, mask, p):
    def ln(v, a, b):
        mean = v.mean(-1, keepdims=True)
        var = ((v - mean) ** 2).sum(-1, keepdims=True) / (v.shape[-1] - 1)
        return a * (v - mean) / (jnp.sqrt(var) + EPS) + b

    b, s, d = x.shape
    n1 = ln(x, p["ln1_a"], p["ln1_b"])
    q = n1 @ p["wq"] + p["bq"]
    k = n1 @ p["wk"] + p["bk"]
    v = n1 @ p["wv"] + p["bv"]
    qh = q.reshape(b, s, H, DK).transpose(0, 2, 1, 3)
    kh = k.reshape(b, s, H, DK).transpose(0, 2, 1, 3)
    vh = v.reshape(b, s, H, DK).transpose(0, 2, 1, 3)
    scores = qh @ kh.transpose(0, 1, 3, 2) / math.sqrt(DK)
    scores = jnp.where(mask[:, :, None, :] == 0, -1e9, scores)
    pw = jax.nn.softmax(scores, axis=-1)
    att = (pw @ vh).transpose(0, 2, 1, 3).reshape(b, s, d)
    att = att @ p["wo"] + p["bo"]
    x1 = x + att
    n2 = ln(x1, p["ln2_a"], p["ln2_b"])
    ff = jnp.maximum(n2 @ p["w1"] + p["b1"], 0.0) @ p["w2"] + p["b2"]
    return x1 + ff


def init_params(key):
    keys = jax.random.split(key, 8)
    scale = 0.1
    return {
        "ln1_a": jnp.ones((D,), jnp.float32),
        "ln1_b": jnp.zeros((D,), jnp.float32),
        "wq": scale * jax.random.normal(keys[0], (D, D), jnp.float32),
        "bq": jnp.zeros((D,), jnp.float32),
        "wk": scale * jax.random.normal(keys[1], (D, D), jnp.float32),
        "bk": jnp.zeros((D,), jnp.float32),
        "wv": scale * jax.random.normal(keys[2], (D, D), jnp.float32),
        "bv": jnp.zeros((D,), jnp.float32),
        "wo": scale * jax.random.normal(keys[3], (D, D), jnp.float32),
        "bo": jnp.zeros((D,), jnp.float32),
        "ln2_a": jnp.ones((D,), jnp.float32),
        "ln2_b": jnp.zeros((D,), jnp.float32),
        "w1": scale * jax.random.normal(keys[4], (D, D_FF), jnp.float32),
        "b1": jnp.zeros((D_FF,), jnp.float32),
        "w2": scale * jax.random.normal(keys[5], (D_FF, D), jnp.float32),
        "b2": jnp.zeros((D,), jnp.float32),
    }


if __name__ == "__main__":
    key = jax.random.PRNGKey(0)
    k_x, k_p = jax.random.split(key)

    x = jax.random.normal(k_x, (B, S, D), jnp.float32)
    # mask: keep all positions for batch 0, mask the last 2 positions for batch 1
    mask = jnp.ones((B, 1, S), jnp.float32)
    mask = mask.at[1, 0, -2:].set(0.0)

    params = init_params(k_p)
    packed = pack_params(params)                     # packed once, reused per call

    out = encoder_layer(x, mask, packed)
    out = jax.block_until_ready(out)

    # reference at full f32 matmul precision for a fair comparison
    with jax.default_matmul_precision("float32"):
        ref = ref_encoder_layer(x, mask, params)

    assert out.shape == (B, S, D)
    assert jnp.allclose(out, ref, rtol=5e-4, atol=5e-4), "mismatch vs JAX reference"

    print("KERNEL_OK")
</pallas_src>

<mosaic_0001>
module attributes {stable_mosaic.version = 11 : i64} {
  func.func @encoder_layer_kernel(%arg0: i32, %arg1: memref<1x8x32xf32, #tpu.memory_space<vmem>>, %arg2: memref<1x1x8xf32, #tpu.memory_space<vmem>>, %arg3: memref<32x128xf32, #tpu.memory_space<vmem>>, %arg4: memref<96x64xf32, #tpu.memory_space<vmem>>, %arg5: memref<8x96xf32, #tpu.memory_space<vmem>>, %arg6: memref<1x8x32xf32, #tpu.memory_space<vmem>>) attributes {dimension_semantics = [#tpu.dimension_semantics<parallel>], iteration_bounds = array<i64: 2>, scalar_prefetch = 0 : i64, scratch_operands = 0 : i64, tpu.core_type = #tpu.core_type<tc>, window_params = [{transform_indices = @transform_0, window_bounds = array<i64: 1, 8, 32>}, {transform_indices = @transform_1, window_bounds = array<i64: 1, 1, 8>}, {pipeline_mode = #tpu.pipeline_mode<synchronous>, transform_indices = @transform_2, window_bounds = array<i64: 32, 128>}, {pipeline_mode = #tpu.pipeline_mode<synchronous>, transform_indices = @transform_3, window_bounds = array<i64: 96, 64>}, {pipeline_mode = #tpu.pipeline_mode<synchronous>, transform_indices = @transform_4, window_bounds = array<i64: 8, 96>}, {transform_indices = @transform_5, window_bounds = array<i64: 1, 8, 32>}]} {
    %c0 = arith.constant 0 : index
    %c0_0 = arith.constant 0 : index
    %c0_1 = arith.constant 0 : index
    %0 = vector.load %arg1[%c0, %c0_0, %c0_1] : memref<1x8x32xf32, #tpu.memory_space<vmem>>, vector<1x8x32xf32>
    %1 = vector.shape_cast %0 : vector<1x8x32xf32> to vector<8x32xf32>
    %c0_2 = arith.constant 0 : index
    %c0_3 = arith.constant 0 : index
    %2 = vector.load %arg5[%c0_2, %c0_3] : memref<8x96xf32, #tpu.memory_space<vmem>>, vector<1x32xf32>
    %c1 = arith.constant 1 : index
    %c0_4 = arith.constant 0 : index
    %3 = vector.load %arg5[%c1, %c0_4] : memref<8x96xf32, #tpu.memory_space<vmem>>, vector<1x32xf32>
    %c2 = arith.constant 2 : index
    %c0_5 = arith.constant 0 : index
    %4 = vector.load %arg5[%c2, %c0_5] : memref<8x96xf32, #tpu.memory_space<vmem>>, vector<1x32xf32>
    %c3 = arith.constant 3 : index
    %c0_6 = arith.constant 0 : index
    %5 = vector.load %arg5[%c3, %c0_6] : memref<8x96xf32, #tpu.memory_space<vmem>>, vector<1x32xf32>
    %c4 = arith.constant 4 : index
    %c0_7 = arith.constant 0 : index
    %6 = vector.load %arg5[%c4, %c0_7] : memref<8x96xf32, #tpu.memory_space<vmem>>, vector<1x32xf32>
    %c5 = arith.constant 5 : index
    %c0_8 = arith.constant 0 : index
    %7 = vector.load %arg5[%c5, %c0_8] : memref<8x96xf32, #tpu.memory_space<vmem>>, vector<1x32xf32>
    %c6 = arith.constant 6 : index
    %c0_9 = arith.constant 0 : index
    %8 = vector.load %arg5[%c6, %c0_9] : memref<8x96xf32, #tpu.memory_space<vmem>>, vector<1x96xf32>
    %c7 = arith.constant 7 : index
    %c0_10 = arith.constant 0 : index
    %9 = vector.load %arg5[%c7, %c0_10] : memref<8x96xf32, #tpu.memory_space<vmem>>, vector<1x64xf32>
    %cst = arith.constant dense<0.000000e+00> : vector<8xf32>
    %10 = vector.multi_reduction <add>, %1, %cst [1] : vector<8x32xf32> to vector<8xf32>
    %11 = vector.shape_cast %10 : vector<8xf32> to vector<8x1xf32>
    %cst_11 = arith.constant 3.200000e+01 : f32
    %12 = vector.broadcast %cst_11 : f32 to vector<8x1xf32>
    %13 = arith.divf %11, %12 : vector<8x1xf32>
    %14 = vector.broadcast %13 : vector<8x1xf32> to vector<8x32xf32>
    %15 = arith.subf %1, %14 : vector<8x32xf32>
    %16 = arith.mulf %15, %15 : vector<8x32xf32>
    %cst_12 = arith.constant dense<0.000000e+00> : vector<8xf32>
    %17 = vector.multi_reduction <add>, %16, %cst_12 [1] : vector<8x32xf32> to vector<8xf32>
    %18 = vector.shape_cast %17 : vector<8xf32> to vector<8x1xf32>
    %cst_13 = arith.constant 3.100000e+01 : f32
    %19 = vector.broadcast %cst_13 : f32 to vector<8x1xf32>
    %20 = arith.divf %18, %19 : vector<8x1xf32>
    %21 = math.sqrt %20 : vector<8x1xf32>
    %cst_14 = arith.constant 9.99999997E-7 : f32
    %22 = vector.broadcast %cst_14 : f32 to vector<8x1xf32>
    %23 = arith.addf %21, %22 : vector<8x1xf32>
    %24 = tpu.reciprocal %23 : vector<8x1xf32> -> vector<8x1xf32>
    %25 = vector.broadcast %13 : vector<8x1xf32> to vector<8x32xf32>
    %26 = arith.subf %1, %25 : vector<8x32xf32>
    %27 = vector.broadcast %2 : vector<1x32xf32> to vector<8x32xf32>
    %28 = arith.mulf %27, %26 : vector<8x32xf32>
    %29 = vector.broadcast %24 : vector<8x1xf32> to vector<8x32xf32>
    %30 = arith.mulf %28, %29 : vector<8x32xf32>
    %31 = vector.broadcast %3 : vector<1x32xf32> to vector<8x32xf32>
    %32 = arith.addf %30, %31 : vector<8x32xf32>
    %c0_15 = arith.constant 0 : index
    %c0_16 = arith.constant 0 : index
    %33 = vector.load %arg3[%c0_15, %c0_16] : memref<32x128xf32, #tpu.memory_space<vmem>>, vector<32x96xf32>
    %cst_17 = arith.constant dense<0.000000e+00> : vector<8x96xf32>
    %34 = tpu.matmul %32, %33, %cst_17 {dimension_numbers = #tpu.dot_dimension_numbers<[1], [0], [0], [1], [0, 0, 1, 1], [], []>} : vector<8x32xf32>, vector<32x96xf32>, vector<8x96xf32> -> vector<8x96xf32>
    %35 = vector.broadcast %8 : vector<1x96xf32> to vector<8x96xf32>
    %36 = arith.addf %34, %35 : vector<8x96xf32>
    %c0_18 = arith.constant 0 : index
    %c0_19 = arith.constant 0 : index
    %c0_20 = arith.constant 0 : index
    %37 = vector.load %arg2[%c0_18, %c0_19, %c0_20] : memref<1x1x8xf32, #tpu.memory_space<vmem>>, vector<1x1x8xf32>
    %38 = vector.shape_cast %37 : vector<1x1x8xf32> to vector<1x8xf32>
    %39 = vector.extract_strided_slice %36 {offsets = [0, 0], sizes = [8, 8], strides = [1, 1]} : vector<8x96xf32> to vector<8x8xf32>
    %40 = vector.extract_strided_slice %36 {offsets = [0, 32], sizes = [8, 8], strides = [1, 1]} : vector<8x96xf32> to vector<8x8xf32>
    %41 = vector.extract_strided_slice %36 {offsets = [0, 64], sizes = [8, 8], strides = [1, 1]} : vector<8x96xf32> to vector<8x8xf32>
    "tpu.trace_start"() <{level = 10 : i32, message = "qc,kc->qk"}> : () -> ()
    %cst_21 = arith.constant dense<0.000000e+00> : vector<8x8xf32>
    %42 = tpu.matmul %39, %40, %cst_21 {dimension_numbers = #tpu.dot_dimension_numbers<[1], [1], [0], [0], [0, 0, 1, 0], [], []>} : vector<8x8xf32>, vector<8x8xf32>, vector<8x8xf32> -> vector<8x8xf32>
    "tpu.trace_stop"() : () -> ()
    %43 = vector.broadcast %38 : vector<1x8xf32> to vector<8x8xf32>
    %44 = arith.addf %42, %43 : vector<8x8xf32>
    %cst_22 = arith.constant dense<0xFF800000> : vector<8xf32>
    %45 = vector.multi_reduction <maximumf>, %44, %cst_22 [1] : vector<8x8xf32> to vector<8xf32>
    %46 = vector.shape_cast %45 : vector<8xf32> to vector<8x1xf32>
    %47 = vector.broadcast %46 : vector<8x1xf32> to vector<8x8xf32>
    %48 = arith.subf %44, %47 : vector<8x8xf32>
    %49 = math.exp %48 : vector<8x8xf32>
    %cst_23 = arith.constant dense<0.000000e+00> : vector<8xf32>
    %50 = vector.multi_reduction <add>, %49, %cst_23 [1] : vector<8x8xf32> to vector<8xf32>
    %51 = vector.shape_cast %50 : vector<8xf32> to vector<8x1xf32>
    %52 = tpu.reciprocal %51 : vector<8x1xf32> -> vector<8x1xf32>
    %53 = vector.broadcast %52 : vector<8x1xf32> to vector<8x8xf32>
    %54 = arith.mulf %49, %53 : vector<8x8xf32>
    %cst_24 = arith.constant dense<0.000000e+00> : vector<8x8xf32>
    %55 = tpu.matmul %54, %41, %cst_24 {dimension_numbers = #tpu.dot_dimension_numbers<[1], [0], [0], [1], [0, 0, 1, 1], [], []>} : vector<8x8xf32>, vector<8x8xf32>, vector<8x8xf32> -> vector<8x8xf32>
    %56 = vector.extract_strided_slice %36 {offsets = [0, 8], sizes = [8, 8], strides = [1, 1]} : vector<8x96xf32> to vector<8x8xf32>
    %57 = vector.extract_strided_slice %36 {offsets = [0, 40], sizes = [8, 8], strides = [1, 1]} : vector<8x96xf32> to vector<8x8xf32>
    %58 = vector.extract_strided_slice %36 {offsets = [0, 72], sizes = [8, 8], strides = [1, 1]} : vector<8x96xf32> to vector<8x8xf32>
    "tpu.trace_start"() <{level = 10 : i32, message = "qc,kc->qk"}> : () -> ()
    %cst_25 = arith.constant dense<0.000000e+00> : vector<8x8xf32>
    %59 = tpu.matmul %56, %57, %cst_25 {dimension_numbers = #tpu.dot_dimension_numbers<[1], [1], [0], [0], [0, 0, 1, 0], [], []>} : vector<8x8xf32>, vector<8x8xf32>, vector<8x8xf32> -> vector<8x8xf32>
    "tpu.trace_stop"() : () -> ()
    %60 = vector.broadcast %38 : vector<1x8xf32> to vector<8x8xf32>
    %61 = arith.addf %59, %60 : vector<8x8xf32>
    %cst_26 = arith.constant dense<0xFF800000> : vector<8xf32>
    %62 = vector.multi_reduction <maximumf>, %61, %cst_26 [1] : vector<8x8xf32> to vector<8xf32>
    %63 = vector.shape_cast %62 : vector<8xf32> to vector<8x1xf32>
    %64 = vector.broadcast %63 : vector<8x1xf32> to vector<8x8xf32>
    %65 = arith.subf %61, %64 : vector<8x8xf32>
    %66 = math.exp %65 : vector<8x8xf32>
    %cst_27 = arith.constant dense<0.000000e+00> : vector<8xf32>
    %67 = vector.multi_reduction <add>, %66, %cst_27 [1] : vector<8x8xf32> to vector<8xf32>
    %68 = vector.shape_cast %67 : vector<8xf32> to vector<8x1xf32>
    %69 = tpu.reciprocal %68 : vector<8x1xf32> -> vector<8x1xf32>
    %70 = vector.broadcast %69 : vector<8x1xf32> to vector<8x8xf32>
    %71 = arith.mulf %66, %70 : vector<8x8xf32>
    %cst_28 = arith.constant dense<0.000000e+00> : vector<8x8xf32>
    %72 = tpu.matmul %71, %58, %cst_28 {dimension_numbers = #tpu.dot_dimension_numbers<[1], [0], [0], [1], [0, 0, 1, 1], [], []>} : vector<8x8xf32>, vector<8x8xf32>, vector<8x8xf32> -> vector<8x8xf32>
    %73 = vector.extract_strided_slice %36 {offsets = [0, 16], sizes = [8, 8], strides = [1, 1]} : vector<8x96xf32> to vector<8x8xf32>
    %74 = vector.extract_strided_slice %36 {offsets = [0, 48], sizes = [8, 8], strides = [1, 1]} : vector<8x96xf32> to vector<8x8xf32>
    %75 = vector.extract_strided_slice %36 {offsets = [0, 80], sizes = [8, 8], strides = [1, 1]} : vector<8x96xf32> to vector<8x8xf32>
    "tpu.trace_start"() <{level = 10 : i32, message = "qc,kc->qk"}> : () -> ()
    %cst_29 = arith.constant dense<0.000000e+00> : vector<8x8xf32>
    %76 = tpu.matmul %73, %74, %cst_29 {dimension_numbers = #tpu.dot_dimension_numbers<[1], [1], [0], [0], [0, 0, 1, 0], [], []>} : vector<8x8xf32>, vector<8x8xf32>, vector<8x8xf32> -> vector<8x8xf32>
    "tpu.trace_stop"() : () -> ()
    %77 = vector.broadcast %38 : vector<1x8xf32> to vector<8x8xf32>
    %78 = arith.addf %76, %77 : vector<8x8xf32>
    %cst_30 = arith.constant dense<0xFF800000> : vector<8xf32>
    %79 = vector.multi_reduction <maximumf>, %78, %cst_30 [1] : vector<8x8xf32> to vector<8xf32>
    %80 = vector.shape_cast %79 : vector<8xf32> to vector<8x1xf32>
    %81 = vector.broadcast %80 : vector<8x1xf32> to vector<8x8xf32>
    %82 = arith.subf %78, %81 : vector<8x8xf32>
    %83 = math.exp %82 : vector<8x8xf32>
    %cst_31 = arith.constant dense<0.000000e+00> : vector<8xf32>
    %84 = vector.multi_reduction <add>, %83, %cst_31 [1] : vector<8x8xf32> to vector<8xf32>
    %85 = vector.shape_cast %84 : vector<8xf32> to vector<8x1xf32>
    %86 = tpu.reciprocal %85 : vector<8x1xf32> -> vector<8x1xf32>
    %87 = vector.broadcast %86 : vector<8x1xf32> to vector<8x8xf32>
    %88 = arith.mulf %83, %87 : vector<8x8xf32>
    %cst_32 = arith.constant dense<0.000000e+00> : vector<8x8xf32>
    %89 = tpu.matmul %88, %75, %cst_32 {dimension_numbers = #tpu.dot_dimension_numbers<[1], [0], [0], [1], [0, 0, 1, 1], [], []>} : vector<8x8xf32>, vector<8x8xf32>, vector<8x8xf32> -> vector<8x8xf32>
    %90 = vector.extract_strided_slice %36 {offsets = [0, 24], sizes = [8, 8], strides = [1, 1]} : vector<8x96xf32> to vector<8x8xf32>
    %91 = vector.extract_strided_slice %36 {offsets = [0, 56], sizes = [8, 8], strides = [1, 1]} : vector<8x96xf32> to vector<8x8xf32>
    %92 = vector.extract_strided_slice %36 {offsets = [0, 88], sizes = [8, 8], strides = [1, 1]} : vector<8x96xf32> to vector<8x8xf32>
    "tpu.trace_start"() <{level = 10 : i32, message = "qc,kc->qk"}> : () -> ()
    %cst_33 = arith.constant dense<0.000000e+00> : vector<8x8xf32>
    %93 = tpu.matmul %90, %91, %cst_33 {dimension_numbers = #tpu.dot_dimension_numbers<[1], [1], [0], [0], [0, 0, 1, 0], [], []>} : vector<8x8xf32>, vector<8x8xf32>, vector<8x8xf32> -> vector<8x8xf32>
    "tpu.trace_stop"() : () -> ()
    %94 = vector.broadcast %38 : vector<1x8xf32> to vector<8x8xf32>
    %95 = arith.addf %93, %94 : vector<8x8xf32>
    %cst_34 = arith.constant dense<0xFF800000> : vector<8xf32>
    %96 = vector.multi_reduction <maximumf>, %95, %cst_34 [1] : vector<8x8xf32> to vector<8xf32>
    %97 = vector.shape_cast %96 : vector<8xf32> to vector<8x1xf32>
    %98 = vector.broadcast %97 : vector<8x1xf32> to vector<8x8xf32>
    %99 = arith.subf %95, %98 : vector<8x8xf32>
    %100 = math.exp %99 : vector<8x8xf32>
    %cst_35 = arith.constant dense<0.000000e+00> : vector<8xf32>
    %101 = vector.multi_reduction <add>, %100, %cst_35 [1] : vector<8x8xf32> to vector<8xf32>
    %102 = vector.shape_cast %101 : vector<8xf32> to vector<8x1xf32>
    %103 = tpu.reciprocal %102 : vector<8x1xf32> -> vector<8x1xf32>
    %104 = vector.broadcast %103 : vector<8x1xf32> to vector<8x8xf32>
    %105 = arith.mulf %100, %104 : vector<8x8xf32>
    %cst_36 = arith.constant dense<0.000000e+00> : vector<8x8xf32>
    %106 = tpu.matmul %105, %92, %cst_36 {dimension_numbers = #tpu.dot_dimension_numbers<[1], [0], [0], [1], [0, 0, 1, 1], [], []>} : vector<8x8xf32>, vector<8x8xf32>, vector<8x8xf32> -> vector<8x8xf32>
    %107 = tpu.concatenate %55, %72, %89, %106 in 1 : vector<8x8xf32>, vector<8x8xf32>, vector<8x8xf32>, vector<8x8xf32> -> vector<8x32xf32>
    %c0_37 = arith.constant 0 : index
    %c96 = arith.constant 96 : index
    %108 = vector.load %arg3[%c0_37, %c96] : memref<32x128xf32, #tpu.memory_space<vmem>>, vector<32x32xf32>
    %cst_38 = arith.constant dense<0.000000e+00> : vector<8x32xf32>
    %109 = tpu.matmul %107, %108, %cst_38 {dimension_numbers = #tpu.dot_dimension_numbers<[1], [0], [0], [1], [0, 0, 1, 1], [], []>} : vector<8x32xf32>, vector<32x32xf32>, vector<8x32xf32> -> vector<8x32xf32>
    %110 = vector.broadcast %6 : vector<1x32xf32> to vector<8x32xf32>
    %111 = arith.addf %109, %110 : vector<8x32xf32>
    %112 = arith.addf %1, %111 : vector<8x32xf32>
    %cst_39 = arith.constant dense<0.000000e+00> : vector<8xf32>
    %113 = vector.multi_reduction <add>, %112, %cst_39 [1] : vector<8x32xf32> to vector<8xf32>
    %114 = vector.shape_cast %113 : vector<8xf32> to vector<8x1xf32>
    %cst_40 = arith.constant 3.200000e+01 : f32
    %115 = vector.broadcast %cst_40 : f32 to vector<8x1xf32>
    %116 = arith.divf %114, %115 : vector<8x1xf32>
    %117 = vector.broadcast %116 : vector<8x1xf32> to vector<8x32xf32>
    %118 = arith.subf %112, %117 : vector<8x32xf32>
    %119 = arith.mulf %118, %118 : vector<8x32xf32>
    %cst_41 = arith.constant dense<0.000000e+00> : vector<8xf32>
    %120 = vector.multi_reduction <add>, %119, %cst_41 [1] : vector<8x32xf32> to vector<8xf32>
    %121 = vector.shape_cast %120 : vector<8xf32> to vector<8x1xf32>
    %cst_42 = arith.constant 3.100000e+01 : f32
    %122 = vector.broadcast %cst_42 : f32 to vector<8x1xf32>
    %123 = arith.divf %121, %122 : vector<8x1xf32>
    %124 = math.sqrt %123 : vector<8x1xf32>
    %cst_43 = arith.constant 9.99999997E-7 : f32
    %125 = vector.broadcast %cst_43 : f32 to vector<8x1xf32>
    %126 = arith.addf %124, %125 : vector<8x1xf32>
    %127 = tpu.reciprocal %126 : vector<8x1xf32> -> vector<8x1xf32>
    %128 = vector.broadcast %116 : vector<8x1xf32> to vector<8x32xf32>
    %129 = arith.subf %112, %128 : vector<8x32xf32>
    %130 = vector.broadcast %4 : vector<1x32xf32> to vector<8x32xf32>
    %131 = arith.mulf %130, %129 : vector<8x32xf32>
    %132 = vector.broadcast %127 : vector<8x1xf32> to vector<8x32xf32>
    %133 = arith.mulf %131, %132 : vector<8x32xf32>
    %134 = vector.broadcast %5 : vector<1x32xf32> to vector<8x32xf32>
    %135 = arith.addf %133, %134 : vector<8x32xf32>
    %c0_44 = arith.constant 0 : index
    %c0_45 = arith.constant 0 : index
    %136 = vector.load %arg4[%c0_44, %c0_45] : memref<96x64xf32, #tpu.memory_space<vmem>>, vector<32x64xf32>
    %cst_46 = arith.constant dense<0.000000e+00> : vector<8x64xf32>
    %137 = tpu.matmul %135, %136, %cst_46 {dimension_numbers = #tpu.dot_dimension_numbers<[1], [0], [0], [1], [0, 0, 1, 1], [], []>} : vector<8x32xf32>, vector<32x64xf32>, vector<8x64xf32> -> vector<8x64xf32>
    %138 = vector.broadcast %9 : vector<1x64xf32> to vector<8x64xf32>
    %139 = arith.addf %137, %138 : vector<8x64xf32>
    %cst_47 = arith.constant 0.000000e+00 : f32
    %140 = vector.broadcast %cst_47 : f32 to vector<8x64xf32>
    %141 = arith.maximumf %139, %140 : vector<8x64xf32>
    %c32 = arith.constant 32 : index
    %c0_48 = arith.constant 0 : index
    %142 = vector.load %arg4[%c32, %c0_48] : memref<96x64xf32, #tpu.memory_space<vmem>>, vector<64x32xf32>
    %cst_49 = arith.constant dense<0.000000e+00> : vector<8x32xf32>
    %143 = tpu.matmul %141, %142, %cst_49 {dimension_numbers = #tpu.dot_dimension_numbers<[1], [0], [0], [1], [0, 0, 1, 1], [], []>} : vector<8x64xf32>, vector<64x32xf32>, vector<8x32xf32> -> vector<8x32xf32>
    %144 = vector.broadcast %7 : vector<1x32xf32> to vector<8x32xf32>
    %145 = arith.addf %143, %144 : vector<8x32xf32>
    %146 = arith.addf %112, %145 : vector<8x32xf32>
    %c0_50 = arith.constant 0 : index
    %c0_51 = arith.constant 0 : index
    %c0_52 = arith.constant 0 : index
    %147 = vector.load %arg6[%c0_50, %c0_51, %c0_52] : memref<1x8x32xf32, #tpu.memory_space<vmem>>, vector<1x8x32xf32>
    %148 = vector.shape_cast %147 : vector<1x8x32xf32> to vector<8x32xf32>
    %149 = vector.shape_cast %146 : vector<8x32xf32> to vector<1x8x32xf32>
    tpu.vector_store %arg6[%c0_50, %c0_51, %c0_52], %149 {strides = array<i32>} : memref<1x8x32xf32, #tpu.memory_space<vmem>>, vector<1x8x32xf32>,
    return
  }
  func.func @transform_0(%arg0: i32) -> (i32, i32, i32) {
    %c0_i32 = arith.constant 0 : i32
    %c0_i32_0 = arith.constant 0 : i32
    %c0_i32_1 = arith.constant 0 : i32
    return %arg0, %c0_i32, %c0_i32_0 : i32, i32, i32
  }
  func.func @transform_1(%arg0: i32) -> (i32, i32, i32) {
    %c0_i32 = arith.constant 0 : i32
    %c0_i32_0 = arith.constant 0 : i32
    %c0_i32_1 = arith.constant 0 : i32
    return %arg0, %c0_i32, %c0_i32_0 : i32, i32, i32
  }
  func.func @transform_2(%arg0: i32) -> (i32, i32) {
    %c0_i32 = arith.constant 0 : i32
    %c0_i32_0 = arith.constant 0 : i32
    %c0_i32_1 = arith.constant 0 : i32
    return %c0_i32, %c0_i32_0 : i32, i32
  }
  func.func @transform_3(%arg0: i32) -> (i32, i32) {
    %c0_i32 = arith.constant 0 : i32
    %c0_i32_0 = arith.constant 0 : i32
    %c0_i32_1 = arith.constant 0 : i32
    return %c0_i32, %c0_i32_0 : i32, i32
  }
  func.func @transform_4(%arg0: i32) -> (i32, i32) {
    %c0_i32 = arith.constant 0 : i32
    %c0_i32_0 = arith.constant 0 : i32
    %c0_i32_1 = arith.constant 0 : i32
    return %c0_i32, %c0_i32_0 : i32, i32
  }
  func.func @transform_5(%arg0: i32) -> (i32, i32, i32) {
    %c0_i32 = arith.constant 0 : i32
    %c0_i32_0 = arith.constant 0 : i32
    %c0_i32_1 = arith.constant 0 : i32
    return %arg0, %c0_i32, %c0_i32_0 : i32, i32, i32
  }
}

</mosaic_0001>

<llo_original>
// kernel: encoder_layer.1
$region0: #{encoder_layer.1}
  #allocation0 [shape = 'u32[]', space=smem, size = 0x4, offset = 0x4, fixed_abs, tag = 'smem constant byte address 0x4 - core index']
  #allocation1 [shape = 'u32[144,128]{1,0:T(1,128)}', space=vmem, size = 0x12000, scoped, tag = 'internal scratch']
  %s0 = inlined_call_operand.vmem [shape: f32[2,8,32], index: 0, kind: input, shape index: {}]
  %s1 = inlined_call_operand.vmem [shape: f32[2,1,8], index: 1, kind: input, shape index: {}]
  %s2 = inlined_call_operand.vmem [shape: f32[32,128], index: 2, kind: input, shape index: {}]
  %s3 = inlined_call_operand.vmem [shape: f32[96,64], index: 3, kind: input, shape index: {}]
  %s4 = inlined_call_operand.vmem [shape: f32[8,96], index: 4, kind: input, shape index: {}]
  %s5 = inlined_call_operand.hbm [shape: f32[2,8,32], index: 5, kind: output, shape index: {}]
  %s6 = sld [smem:[#allocation0]]
  $region53: #{encoder_layer.1} parent=0
    _
  %s8 = ssub.s32 1, %s6
  %s9 = scalar_select 0, %s8, %s6
  $region1: #{encoder_layer.1} parent=0
    #allocation2 [shape = 'u8[8192]{0}', space=vmem, size = 0x2000, scoped, tag = 'output window, operand 0']
    #allocation3 [shape = 's32[2]{0}', space=sflag, size = 0x8, scoped, tag = 'scoped memory for encoder_layer.1']
    %10 = vsyncpa [#allocation3], 0
    %s11 = scalar_lea.sflag [#allocation3], 1
    %12 = vsyncpa %s11, 0
    loop: start=0, step=1, limit=4
    $region2: #{encoder_layer.1} parent=1 // loop_pre_header
      _
    $region3: #{encoder_layer.1} parent=1 // loop_header
      %s14 = sphi 0, %s18
      %p15 = scmp.ge.s32.totalorder %s14, 4
      %s24 = sphi 0, %s26
      %s27 = sphi 0, %s24
      %s28 = sphi 0, %s27
      %s44 = sphi 0, %s28
      %s50 = sphi 0, %s52
      %s53 = sphi 0, %s50
      %s54 = sphi 0, %s53
      %s70 = sphi 0, %s54
      %s74 = sphi 0, %s74
      %s76 = sphi 0, %s74
      %s77 = sphi 0, %s76
      %s91 = sphi 0, %s77
      %s95 = sphi 0, %s95
      %s97 = sphi 0, %s95
      %s98 = sphi 0, %s97
      %s112 = sphi 0, %s98
      %s116 = sphi 0, %s116
      %s118 = sphi 0, %s116
      %s119 = sphi 0, %s118
      %s133 = sphi 0, %s119
      %s139 = sphi 0, %s141
      %s142 = sphi 0, %s139
      %s143 = sphi 0, %s142
      %s159 = sphi 0, %s143
    $region4: #{encoder_layer.1} parent=1 // loop_header_branch
      %17 = sbr.rel (%p15) target = $region8
    $region5: #{encoder_layer.1} parent=1 // loop_body
      %s19 = ssub.s32 %s14, 1
      %s20 = ssub.s32 %s14, 2
      %s21 = sadd.s32 %s14, 1
      %s22 = ssub.s32 %s14, %s21
      %p23 = scmp.eq.s32.totalorder %s22, 0
      %s25 = sadd.s32 %s24, 1
      %s26 = scalar_select %p23, %s24, %s25
      %p29 = pneg %p23
      %p30 = scmp.eq.s32.totalorder %s14, 1
      %p31 = por %p29, %p30
      %p32 = scmp.ne.s32.totalorder %s24, %s27
      %p33 = scmp.eq.s32.totalorder %s14, 0
      %p34 = por %p32, %p33
      %p35 = scmp.ne.s32.totalorder %s24, %s27
      %p36 = scmp.eq.s32.totalorder %s19, 1
      %p37 = por %p35, %p36
      %p38 = scmp.ne.s32.totalorder %s27, %s28
      %p39 = scmp.eq.s32.totalorder %s19, 0
      %p40 = por %p38, %p39
      %p41 = scmp.ne.s32.totalorder %s27, %s28
      %p42 = scmp.eq.s32.totalorder %s20, 1
      %p43 = por %p41, %p42
      %p45 = scmp.ne.s32.totalorder %s28, %s44
      %p46 = scmp.eq.s32.totalorder %s20, 0
      %p47 = por %p45, %p46
      %s48 = ssub.s32 %s14, %s21
      %p49 = scmp.eq.s32.totalorder %s48, 0
      %s51 = sadd.s32 %s50, 1
      %s52 = scalar_select %p49, %s50, %s51
      %p55 = pneg %p49
      %p56 = scmp.eq.s32.totalorder %s14, 1
      %p57 = por %p55, %p56
      %p58 = scmp.ne.s32.totalorder %s50, %s53
      %p59 = scmp.eq.s32.totalorder %s14, 0
      %p60 = por %p58, %p59
      %p61 = scmp.ne.s32.totalorder %s50, %s53
      %p62 = scmp.eq.s32.totalorder %s19, 1
      %p63 = por %p61, %p62
      %p64 = scmp.ne.s32.totalorder %s53, %s54
      %p65 = scmp.eq.s32.totalorder %s19, 0
      %p66 = por %p64, %p65
      %p67 = scmp.ne.s32.totalorder %s53, %s54
      %p68 = scmp.eq.s32.totalorder %s20, 1
      %p69 = por %p67, %p68
      %p71 = scmp.ne.s32.totalorder %s54, %s70
      %p72 = scmp.eq.s32.totalorder %s20, 0
      %p73 = por %p71, %p72
      %s75 = sadd.s32 %s74, 1
      %p78 = scmp.eq.s32.totalorder %s14, 1
      %p79 = scmp.ne.s32.totalorder %s74, %s76
      %p80 = scmp.eq.s32.totalorder %s14, 0
      %p81 = por %p79, %p80
      %p82 = scmp.ne.s32.totalorder %s74, %s76
      %p83 = scmp.eq.s32.totalorder %s19, 1
      %p84 = por %p82, %p83
      %p85 = scmp.ne.s32.totalorder %s76, %s77
      %p86 = scmp.eq.s32.totalorder %s19, 0
      %p87 = por %p85, %p86
      %p88 = scmp.ne.s32.totalorder %s76, %s77
      %p89 = scmp.eq.s32.totalorder %s20, 1
      %p90 = por %p88, %p89
      %p92 = scmp.ne.s32.totalorder %s77, %s91
      %p93 = scmp.eq.s32.totalorder %s20, 0
      %p94 = por %p92, %p93
      %s96 = sadd.s32 %s95, 1
      %p99 = scmp.eq.s32.totalorder %s14, 1
      %p100 = scmp.ne.s32.totalorder %s95, %s97
      %p101 = scmp.eq.s32.totalorder %s14, 0
      %p102 = por %p100, %p101
      %p103 = scmp.ne.s32.totalorder %s95, %s97
      %p104 = scmp.eq.s32.totalorder %s19, 1
      %p105 = por %p103, %p104
      %p106 = scmp.ne.s32.totalorder %s97, %s98
      %p107 = scmp.eq.s32.totalorder %s19, 0
      %p108 = por %p106, %p107
      %p109 = scmp.ne.s32.totalorder %s97, %s98
      %p110 = scmp.eq.s32.totalorder %s20, 1
      %p111 = por %p109, %p110
      %p113 = scmp.ne.s32.totalorder %s98, %s112
      %p114 = scmp.eq.s32.totalorder %s20, 0
      %p115 = por %p113, %p114
      %s117 = sadd.s32 %s116, 1
      %p120 = scmp.eq.s32.totalorder %s14, 1
      %p121 = scmp.ne.s32.totalorder %s116, %s118
      %p122 = scmp.eq.s32.totalorder %s14, 0
      %p123 = por %p121, %p122
      %p124 = scmp.ne.s32.totalorder %s116, %s118
      %p125 = scmp.eq.s32.totalorder %s19, 1
      %p126 = por %p124, %p125
      %p127 = scmp.ne.s32.totalorder %s118, %s119
      %p128 = scmp.eq.s32.totalorder %s19, 0
      %p129 = por %p127, %p128
      %p130 = scmp.ne.s32.totalorder %s118, %s119
      %p131 = scmp.eq.s32.totalorder %s20, 1
      %p132 = por %p130, %p131
      %p134 = scmp.ne.s32.totalorder %s119, %s133
      %p135 = scmp.eq.s32.totalorder %s20, 0
      %p136 = por %p134, %p135
      %s137 = ssub.s32 %s14, %s21
      %p138 = scmp.eq.s32.totalorder %s137, 0
      %s140 = sadd.s32 %s139, 1
      %s141 = scalar_select %p138, %s139, %s140
      %p144 = pneg %p138
      %p145 = scmp.eq.s32.totalorder %s14, 1
      %p146 = por %p144, %p145
      %p147 = scmp.ne.s32.totalorder %s139, %s142
      %p148 = scmp.eq.s32.totalorder %s14, 0
      %p149 = por %p147, %p148
      %p150 = scmp.ne.s32.totalorder %s139, %s142
      %p151 = scmp.eq.s32.totalorder %s19, 1
      %p152 = por %p150, %p151
      %p153 = scmp.ne.s32.totalorder %s142, %s143
      %p154 = scmp.eq.s32.totalorder %s19, 0
      %p155 = por %p153, %p154
      %p156 = scmp.ne.s32.totalorder %s142, %s143
      %p157 = scmp.eq.s32.totalorder %s20, 1
      %p158 = por %p156, %p157
      %p160 = scmp.ne.s32.totalorder %s143, %s159
      %p161 = scmp.eq.s32.totalorder %s20, 0
      %p162 = por %p160, %p161
      %p163 = scmp.le.s32.totalorder 1, %s14
      %p164 = scmp.lt.s32.totalorder %s14, 3
      %p165 = pnand %p163, %p164
      %p166 = pneg %p165
      // Predicated region
      $region9: #{encoder_layer.1} parent=5 // pred_check
        _
      $region10: #{encoder_layer.1} parent=5 // pred_check_branch
        %168 = sbr.rel (%p165) target = $region12
      $region11: #{encoder_layer.1} parent=5 // pred_region
        %s169 = ssub.s32 %s14, 1
        // Predicated region
        $region13: #{encoder_layer.1} parent=11 // pred_check
          %p170 = pneg %p87
        $region14: #{encoder_layer.1} parent=11 // pred_check_branch
          %172 = sbr.rel (%p170) target = $region16
        $region15: #{encoder_layer.1} parent=11 // pred_region
          _
        $region16: #{encoder_layer.1} parent=11 // pred_fallthru
          _
        // Predicated region
        $region17: #{encoder_layer.1} parent=11 // pred_check
          %p173 = pneg %p108
        $region18: #{encoder_layer.1} parent=11 // pred_check_branch
          %175 = sbr.rel (%p173) target = $region20
        $region19: #{encoder_layer.1} parent=11 // pred_region
          _
        $region20: #{encoder_layer.1} parent=11 // pred_fallthru
          _
        // Predicated region
        $region21: #{encoder_layer.1} parent=11 // pred_check
          %p176 = pneg %p129
        $region22: #{encoder_layer.1} parent=11 // pred_check_branch
          %178 = sbr.rel (%p176) target = $region24
        $region23: #{encoder_layer.1} parent=11 // pred_region
          _
        $region24: #{encoder_layer.1} parent=11 // pred_fallthru
          _
      $region12: #{encoder_layer.1} parent=5 // pred_fallthru
        _
      %p179 = scmp.lt.s32.totalorder %s14, 2
      // Predicated region
      $region25: #{encoder_layer.1} parent=5 // pred_check
        %p180 = pneg %p179
      $region26: #{encoder_layer.1} parent=5 // pred_check_branch
        %182 = sbr.rel (%p180) target = $region28
      $region27: #{encoder_layer.1} parent=5 // pred_region
        // Predicated region
        $region29: #{encoder_layer.1} parent=27 // pred_check
          %p183 = pneg %p34
        $region30: #{encoder_layer.1} parent=27 // pred_check_branch
          %185 = sbr.rel (%p183) target = $region32
        $region31: #{encoder_layer.1} parent=27 // pred_region
          %p186 = scmp.lt.s32.totalorder %s14, 1
          %s187 = scalar_select %p186, %s14, 1
          %s188 = smul.addr %s187, 8
          %s189 = scalar_lea.vmem %s0, %s188
        $region32: #{encoder_layer.1} parent=27 // pred_fallthru
          _
        // Predicated region
        $region33: #{encoder_layer.1} parent=27 // pred_check
          %p190 = pneg %p60
        $region34: #{encoder_layer.1} parent=27 // pred_check_branch
          %192 = sbr.rel (%p190) target = $region36
        $region35: #{encoder_layer.1} parent=27 // pred_region
          %p193 = scmp.lt.s32.totalorder %s14, 1
          %s194 = scalar_select %p193, %s14, 1
          %s195 = scalar_lea.vmem %s1, %s194
        $region36: #{encoder_layer.1} parent=27 // pred_fallthru
          _
      $region28: #{encoder_layer.1} parent=5 // pred_fallthru
        _
      %p196 = scmp.le.s32.totalorder 1, %s14
      %p197 = scmp.lt.s32.totalorder %s14, 3
      %p198 = pnand %p196, %p197
      %p199 = pneg %p198
      // Predicated region
      $region37: #{encoder_layer.1} parent=5 // pred_check
        _
      $region38: #{encoder_layer.1} parent=5 // pred_check_branch
        %201 = sbr.rel (%p198) target = $region40
      $region39: #{encoder_layer.1} parent=5 // pred_region
        %s202 = ssub.s32 %s14, 1
        %p203 = scmp.lt.s32.totalorder %s19, 1
        %s204 = scalar_select %p203, %s19, 1
        %s205 = smul.addr %s204, 8
        %s206 = scalar_lea.vmem %s0, %s205
        %p207 = pneg %p40
        %p208 = pneg %p37
        %p209 = scmp.lt.s32.totalorder %s19, 1
        %s210 = scalar_select %p209, %s19, 1
        %s211 = scalar_lea.vmem %s1, %s210
        %p212 = pneg %p66
        %p213 = pneg %p63
        %p214 = pneg %p87
        %p215 = pneg %p84
        %p216 = pneg %p108
        %p217 = pneg %p105
        %p218 = pneg %p129
        %p219 = pneg %p126
        %p220 = pneg %p155
        %p221 = pneg %p152
        %s222 = sand.u32 %s142, 1
        %s223 = scalar_lea.sflag [#allocation3], %s222
        %s224 = sand.u32 %s142, 1
        %s225 = smul.addr %s224, 8
        %s226 = scalar_lea.vmem [#allocation2], %s225
        %p227 = scmp.lt.s32.totalorder %s19, 1
        %s228 = scalar_select %p227, %s19, 1
        %s229 = smul.addr %s228, 8
        %s230 = scalar_lea.vmem %s0, %s229
        %p231 = scmp.lt.s32.totalorder %s19, 1
        %s232 = scalar_select %p231, %s19, 1
        %s233 = scalar_lea.vmem %s1, %s232
        %v234 = vld [vmem:[%s230] sm:$0xff]
        %v235 = vld [vmem:[%s4] sm:$0x1]
        %v236 = vld [vmem:[%s4 + $0x1] sm:$0x1]
        %v237 = vld [vmem:[%s4 + $0x2] sm:$0x1]
        %v238 = vld [vmem:[%s4 + $0x3] sm:$0x1]
        %v239 = vld [vmem:[%s4 + $0x4] sm:$0x1]
        %v240 = vld [vmem:[%s4 + $0x5] sm:$0x1]
        %v241 = vld [vmem:[%s4 + $0x6] sm:$0x1]
        %v242 = vld [vmem:[%s4 + $0x7] sm:$0x1]
        %vm243 = vcmask 261120
        %v244 = vsel %vm243, %v234, 0.0
        %245 = vadd.xlane.f32.xlu0 %v244
        %v246 = vpop.xlane.xlu0 %245
        %v247 = vrcp.pop 32.0
        %v248 = vmul.f32 %v246, %v247
        %v249 = vsub.f32 %v234, %v248
        %v250 = vmul.f32 %v249, %v249
        %v251 = vsel %vm243, %v250, 0.0
        %252 = vadd.xlane.f32.xlu0 %v251
        %v253 = vpop.xlane.xlu0 %252
        %v254 = vrcp.pop 31.0
        %v255 = vmul.f32 %v253, %v254
        %v256 = vrsqrt.pop %v255
        %v257 = vmul.f32 %v255, %v256
        %vm258 = vcmp.eq.f32.partialorder %v255, inf
        %v259 = vsel %vm258, %v255, %v257
        %vm260 = vcmp.eq.f32.partialorder %v255, 0.0
        %v261 = vand.u32 %v255, 2147483648
        %v262 = vsel %vm260, %v261, %v259
        %v263 = vadd.f32 %v262, 1e-06
        %v264 = vrcp.pop %v263
        %v265 = vlaneseq
        %v266 = vshrl.u32 %v265, 7
        %v267 = vsub.s32 0, %v266
        %v268 = vrot.slane %v235, %v267
        %v269 = vmul.f32 %v268, %v249
        %v270 = vmul.f32 %v269, %v264
        %v271 = vlaneseq
        %v272 = vshrl.u32 %v271, 7
        %v273 = vsub.s32 0, %v272
        %v274 = vrot.slane %v236, %v273
        %v275 = vadd.f32 %v270, %v274
        %v276 = vld [vmem:[%s2] sm:$0xff]
        %v277 = vld [vmem:[%s2 + $0x8] sm:$0xff]
        %v278 = vld [vmem:[%s2 + $0x10] sm:$0xff]
        %v279 = vld [vmem:[%s2 + $0x18] sm:$0xff]
        %v280 = vlaneseq
        %v281 = vshrl.u32 %v280, 7
        %v282 = vsub.s32 0, %v281
        %v283 = vrot.slane %v241, %v282
        %v285 = vsel %vm243, %v275, 0
        %287 = vmatprep.subr.mxu0 0.0
        %288 = vmatpush1.msra.mxu0 %v276
        %289 = vmatprep.subr.mxu0 0.0
        %290 = vmatpush1.msra.mxu0 %v277
        %291 = vmatprep.subr.mxu0 0.0
        %292 = vmatpush1.msra.mxu0 %v278
        %293 = vmatprep.subr.mxu0 0.0
        %294 = vmatpush1.msra.mxu0 %v279
        %295 = vmatprep.subr.mxu0 0.0
        %296 = vmatpush1.msra.mxu0 0.0
        %297 = vmatprep.subr.mxu0 0.0
        %298 = vmatpush1.msra.mxu0 0.0
        %299 = vmatprep.subr.mxu0 0.0
        %300 = vmatpush1.msra.mxu0 0.0
        %301 = vmatprep.subr.mxu0 0.0
        %302 = vmatpush1.msra.mxu0 0.0
        %303 = vmatprep.subr.mxu0 0.0
        %304 = vmatpush1.msra.mxu0 0.0
        %305 = vmatprep.subr.mxu0 0.0
        %306 = vmatpush1.msra.mxu0 0.0
        %307 = vmatprep.subr.mxu0 0.0
        %308 = vmatpush1.msra.mxu0 0.0
        %309 = vmatprep.subr.mxu0 0.0
        %310 = vmatpush1.msra.mxu0 0.0
        %311 = vmatprep.subr.mxu0 0.0
        %312 = vmatpush1.msra.mxu0 0.0
        %313 = vmatprep.subr.mxu0 0.0
        %314 = vmatpush1.msra.mxu0 0.0
        %315 = vmatprep.subr.mxu0 0.0
        %316 = vmatpush1.msra.mxu0 0.0
        %317 = vmatprep.subr.mxu0 0.0
        %318 = vmatpush1.msra.mxu0 0.0
        %319 = vmatprep.subr.mxu0 0.0
        %320 = vmatpush1.msra.mxu0 0.0
        %321 = vmatprep.subr.mxu0 0.0
        %322 = vmatpush1.msra.mxu0 0.0
        %323 = vmatprep.subr.mxu0 0.0
        %324 = vmatpush1.msra.mxu0 0.0
        %325 = vmatprep.subr.mxu0 0.0
        %326 = vmatpush1.msra.mxu0 0.0
        %327 = vmatprep.subr.mxu0 0.0
        %328 = vmatpush1.msra.mxu0 0.0
        %329 = vmatprep.subr.mxu0 0.0
        %330 = vmatpush1.msra.mxu0 0.0
        %331 = vmatprep.subr.mxu0 0.0
        %332 = vmatpush1.msra.mxu0 0.0
        %333 = vmatprep.subr.mxu0 0.0
        %334 = vmatpush1.msra.mxu0 0.0
        %335 = vmatprep.subr.mxu0 0.0
        %336 = vmatpush1.msra.mxu0 0.0
        %337 = vmatprep.subr.mxu0 0.0
        %338 = vmatpush1.msra.mxu0 0.0
        %339 = vmatprep.subr.mxu0 0.0
        %340 = vmatpush1.msra.mxu0 0.0
        %341 = vmatprep.subr.mxu0 0.0
        %342 = vmatpush1.msra.mxu0 0.0
        %343 = vmatprep.subr.mxu0 0.0
        %344 = vmatpush1.msra.mxu0 0.0
        %345 = vmatprep.subr.mxu0 0.0
        %346 = vmatpush1.msra.mxu0 0.0
        %347 = vmatprep.subr.mxu0 0.0
        %348 = vmatpush1.msra.mxu0 0.0
        %349 = vmatprep.subr.mxu0 0.0
        %350 = vmatpush1.msra.mxu0 0.0
        %351 = vmatprep.mubr.f32.mxu0 0.0
        %352 = vmatmul.mubr.f32.gmra.mrb[0].mxu0 %v285
        %v353 = vpop.f32.mrb[0].mxu0
        %v354 = vadd.f32 %v283, %v353
        %v355 = vpop.f32.mrb[0].mxu0
        %356 = vdwg.mxu0
        %v357 = vld [vmem:[%s233] sm:$0x1]
        %v359 = vlaneseq
        %v360 = vshrl.u32 %v359, 7
        %v361 = vsub.s32 0, %v360
        %v362 = vrot.slane %v357, %v361
        %365 = vrot.lane.b32.xlu0 %v354, 96
        %v366 = vpop.permute.xlu0 %365
        %vm367 = vcmask 64512
        %v368 = vsel %vm367, %v354, 0
        %v370 = vsel %vm367, %v366, 0
        %372 = vmatprep.subr.mxu0 0.0
        %373 = vmatpush1.xpose.msra.mxu0 %v370
        %374 = vmatprep.subr.mxu0 0.0
        %375 = vmatpush1.xpose.msra.mxu0 0.0
        %376 = vmatprep.subr.mxu0 0.0
        %377 = vmatpush1.xpose.msra.mxu0 0.0
        %378 = vmatprep.subr.mxu0 0.0
        %379 = vmatpush1.xpose.msra.mxu0 0.0
        %380 = vmatprep.subr.mxu0 0.0
        %381 = vmatpush1.xpose.msra.mxu0 0.0
        %382 = vmatprep.subr.mxu0 0.0
        %383 = vmatpush1.xpose.msra.mxu0 0.0
        %384 = vmatprep.subr.mxu0 0.0
        %385 = vmatpush1.xpose.msra.mxu0 0.0
        %386 = vmatprep.subr.mxu0 0.0
        %387 = vmatpush1.xpose.msra.mxu0 0.0
        %388 = vmatprep.subr.mxu0 0.0
        %389 = vmatpush1.xpose.msra.mxu0 0.0
        %390 = vmatprep.subr.mxu0 0.0
        %391 = vmatpush1.xpose.msra.mxu0 0.0
        %392 = vmatprep.subr.mxu0 0.0
        %393 = vmatpush1.xpose.msra.mxu0 0.0
        %394 = vmatprep.subr.mxu0 0.0
        %395 = vmatpush1.xpose.msra.mxu0 0.0
        %396 = vmatprep.subr.mxu0 0.0
        %397 = vmatpush1.xpose.msra.mxu0 0.0
        %398 = vmatprep.subr.mxu0 0.0
        %399 = vmatpush1.xpose.msra.mxu0 0.0
        %400 = vmatprep.subr.mxu0 0.0
        %401 = vmatpush1.xpose.msra.mxu0 0.0
        %402 = vmatprep.subr.mxu0 0.0
        %403 = vmatpush1.xpose.msra.mxu0 0.0
        %404 = vmatprep.subr.mxu0 0.0
        %405 = vmatpush1.xpose.msra.mxu0 0.0
        %406 = vmatprep.subr.mxu0 0.0
        %407 = vmatpush1.xpose.msra.mxu0 0.0
        %408 = vmatprep.subr.mxu0 0.0
        %409 = vmatpush1.xpose.msra.mxu0 0.0
        %410 = vmatprep.subr.mxu0 0.0
        %411 = vmatpush1.xpose.msra.mxu0 0.0
        %412 = vmatprep.subr.mxu0 0.0
        %413 = vmatpush1.xpose.msra.mxu0 0.0
        %414 = vmatprep.subr.mxu0 0.0
        %415 = vmatpush1.xpose.msra.mxu0 0.0
        %416 = vmatprep.subr.mxu0 0.0
        %417 = vmatpush1.xpose.msra.mxu0 0.0
        %418 = vmatprep.subr.mxu0 0.0
        %419 = vmatpush1.xpose.msra.mxu0 0.0
        %420 = vmatprep.subr.mxu0 0.0
        %421 = vmatpush1.xpose.msra.mxu0 0.0
        %422 = vmatprep.subr.mxu0 0.0
        %423 = vmatpush1.xpose.msra.mxu0 0.0
        %424 = vmatprep.subr.mxu0 0.0
        %425 = vmatpush1.xpose.msra.mxu0 0.0
        %426 = vmatprep.subr.mxu0 0.0
        %427 = vmatpush1.xpose.msra.mxu0 0.0
        %428 = vmatprep.subr.mxu0 0.0
        %429 = vmatpush1.xpose.msra.mxu0 0.0
        %430 = vmatprep.subr.mxu0 0.0
        %431 = vmatpush1.xpose.msra.mxu0 0.0
        %432 = vmatprep.subr.mxu0 0.0
        %433 = vmatpush1.xpose.msra.mxu0 0.0
        %434 = vmatprep.subr.mxu0 0.0
        %435 = vmatpush1.xpose.msra.mxu0 0.0
        %436 = vmatprep.mubr.f32.mxu0 0.0
        %437 = vmatmul.mubr.f32.gmra.mrb[0].mxu0 %v368
        %v438 = vpop.f32.mrb[0].mxu0
        %v439 = vadd.f32 %v362, %v438
        %v440 = vpop.f32.mrb[0].mxu0
        %441 = vdwg.mxu0
        %v442 = vsel %vm367, %v439, -inf
        %443 = vmax.xlane.f32.xlu0 %v442
        %v444 = vpop.xlane.xlu0 %443
        %v445 = vsub.f32 %v439, %v444
        %v446 = vmul.f32 %v445, 1.442695
        %v447 = vpow.pop %v446
        %v448 = vsel %vm367, %v447, 0.0
        %449 = vadd.xlane.f32.xlu0 %v448
        %v450 = vpop.xlane.xlu0 %449
        %v451 = vrcp.pop %v450
        %v452 = vmul.f32 %v447, %v451
        %453 = vrot.lane.b32.xlu0 %v354, 64
        %v454 = vpop.permute.xlu0 %453
        %v457 = vsel %vm367, %v452, 0
        %459 = vmatprep.subr.mxu0 0.0
        %460 = vmatpush1.msra.mxu0 %v454
        %461 = vmatprep.subr.mxu0 0.0
        %462 = vmatpush1.msra.mxu0 0.0
        %463 = vmatprep.subr.mxu0 0.0
        %464 = vmatpush1.msra.mxu0 0.0
        %465 = vmatprep.subr.mxu0 0.0
        %466 = vmatpush1.msra.mxu0 0.0
        %467 = vmatprep.subr.mxu0 0.0
        %468 = vmatpush1.msra.mxu0 0.0
        %469 = vmatprep.subr.mxu0 0.0
        %470 = vmatpush1.msra.mxu0 0.0
        %471 = vmatprep.subr.mxu0 0.0
        %472 = vmatpush1.msra.mxu0 0.0
        %473 = vmatprep.subr.mxu0 0.0
        %474 = vmatpush1.msra.mxu0 0.0
        %475 = vmatprep.subr.mxu0 0.0
        %476 = vmatpush1.msra.mxu0 0.0
        %477 = vmatprep.subr.mxu0 0.0
        %478 = vmatpush1.msra.mxu0 0.0
        %479 = vmatprep.subr.mxu0 0.0
        %480 = vmatpush1.msra.mxu0 0.0
        %481 = vmatprep.subr.mxu0 0.0
        %482 = vmatpush1.msra.mxu0 0.0
        %483 = vmatprep.subr.mxu0 0.0
        %484 = vmatpush1.msra.mxu0 0.0
        %485 = vmatprep.subr.mxu0 0.0
        %486 = vmatpush1.msra.mxu0 0.0
        %487 = vmatprep.subr.mxu0 0.0
        %488 = vmatpush1.msra.mxu0 0.0
        %489 = vmatprep.subr.mxu0 0.0
        %490 = vmatpush1.msra.mxu0 0.0
        %491 = vmatprep.subr.mxu0 0.0
        %492 = vmatpush1.msra.mxu0 0.0
        %493 = vmatprep.subr.mxu0 0.0
        %494 = vmatpush1.msra.mxu0 0.0
        %495 = vmatprep.subr.mxu0 0.0
        %496 = vmatpush1.msra.mxu0 0.0
        %497 = vmatprep.subr.mxu0 0.0
        %498 = vmatpush1.msra.mxu0 0.0
        %499 = vmatprep.subr.mxu0 0.0
        %500 = vmatpush1.msra.mxu0 0.0
        %501 = vmatprep.subr.mxu0 0.0
        %502 = vmatpush1.msra.mxu0 0.0
        %503 = vmatprep.subr.mxu0 0.0
        %504 = vmatpush1.msra.mxu0 0.0
        %505 = vmatprep.subr.mxu0 0.0
        %506 = vmatpush1.msra.mxu0 0.0
        %507 = vmatprep.subr.mxu0 0.0
        %508 = vmatpush1.msra.mxu0 0.0
        %509 = vmatprep.subr.mxu0 0.0
        %510 = vmatpush1.msra.mxu0 0.0
        %511 = vmatprep.subr.mxu0 0.0
        %512 = vmatpush1.msra.mxu0 0.0
        %513 = vmatprep.subr.mxu0 0.0
        %514 = vmatpush1.msra.mxu0 0.0
        %515 = vmatprep.subr.mxu0 0.0
        %516 = vmatpush1.msra.mxu0 0.0
        %517 = vmatprep.subr.mxu0 0.0
        %518 = vmatpush1.msra.mxu0 0.0
        %519 = vmatprep.subr.mxu0 0.0
        %520 = vmatpush1.msra.mxu0 0.0
        %521 = vmatprep.subr.mxu0 0.0
        %522 = vmatpush1.msra.mxu0 0.0
        %523 = vmatprep.mubr.f32.mxu0 0.0
        %524 = vmatmul.mubr.f32.gmra.mrb[0].mxu0 %v457
        %v525 = vpop.f32.mrb[0].mxu0
        %v526 = vadd.f32 0.0, %v525
        %v527 = vpop.f32.mrb[0].mxu0
        %528 = vdwg.mxu0
        %529 = vrot.lane.b32.xlu0 %v354, 120
        %v530 = vpop.permute.xlu0 %529
        %531 = vrot.lane.b32.xlu0 %v354, 88
        %v532 = vpop.permute.xlu0 %531
        %v533 = vsel %vm367, %v530, 0
        %v535 = vsel %vm367, %v532, 0
        %537 = vmatprep.subr.mxu0 0.0
        %538 = vmatpush1.xpose.msra.mxu0 %v535
        %539 = vmatprep.subr.mxu0 0.0
        %540 = vmatpush1.xpose.msra.mxu0 0.0
        %541 = vmatprep.subr.mxu0 0.0
        %542 = vmatpush1.xpose.msra.mxu0 0.0
        %543 = vmatprep.subr.mxu0 0.0
        %544 = vmatpush1.xpose.msra.mxu0 0.0
        %545 = vmatprep.subr.mxu0 0.0
        %546 = vmatpush1.xpose.msra.mxu0 0.0
        %547 = vmatprep.subr.mxu0 0.0
        %548 = vmatpush1.xpose.msra.mxu0 0.0
        %549 = vmatprep.subr.mxu0 0.0
        %550 = vmatpush1.xpose.msra.mxu0 0.0
        %551 = vmatprep.subr.mxu0 0.0
        %552 = vmatpush1.xpose.msra.mxu0 0.0
        %553 = vmatprep.subr.mxu0 0.0
        %554 = vmatpush1.xpose.msra.mxu0 0.0
        %555 = vmatprep.subr.mxu0 0.0
        %556 = vmatpush1.xpose.msra.mxu0 0.0
        %557 = vmatprep.subr.mxu0 0.0
        %558 = vmatpush1.xpose.msra.mxu0 0.0
        %559 = vmatprep.subr.mxu0 0.0
        %560 = vmatpush1.xpose.msra.mxu0 0.0
        %561 = vmatprep.subr.mxu0 0.0
        %562 = vmatpush1.xpose.msra.mxu0 0.0
        %563 = vmatprep.subr.mxu0 0.0
        %564 = vmatpush1.xpose.msra.mxu0 0.0
        %565 = vmatprep.subr.mxu0 0.0
        %566 = vmatpush1.xpose.msra.mxu0 0.0
        %567 = vmatprep.subr.mxu0 0.0
        %568 = vmatpush1.xpose.msra.mxu0 0.0
        %569 = vmatprep.subr.mxu0 0.0
        %570 = vmatpush1.xpose.msra.mxu0 0.0
        %571 = vmatprep.subr.mxu0 0.0
        %572 = vmatpush1.xpose.msra.mxu0 0.0
        %573 = vmatprep.subr.mxu0 0.0
        %574 = vmatpush1.xpose.msra.mxu0 0.0
        %575 = vmatprep.subr.mxu0 0.0
        %576 = vmatpush1.xpose.msra.mxu0 0.0
        %577 = vmatprep.subr.mxu0 0.0
        %578 = vmatpush1.xpose.msra.mxu0 0.0
        %579 = vmatprep.subr.mxu0 0.0
        %580 = vmatpush1.xpose.msra.mxu0 0.0
        %581 = vmatprep.subr.mxu0 0.0
        %582 = vmatpush1.xpose.msra.mxu0 0.0
        %583 = vmatprep.subr.mxu0 0.0
        %584 = vmatpush1.xpose.msra.mxu0 0.0
        %585 = vmatprep.subr.mxu0 0.0
        %586 = vmatpush1.xpose.msra.mxu0 0.0
        %587 = vmatprep.subr.mxu0 0.0
        %588 = vmatpush1.xpose.msra.mxu0 0.0
        %589 = vmatprep.subr.mxu0 0.0
        %590 = vmatpush1.xpose.msra.mxu0 0.0
        %591 = vmatprep.subr.mxu0 0.0
        %592 = vmatpush1.xpose.msra.mxu0 0.0
        %593 = vmatprep.subr.mxu0 0.0
        %594 = vmatpush1.xpose.msra.mxu0 0.0
        %595 = vmatprep.subr.mxu0 0.0
        %596 = vmatpush1.xpose.msra.mxu0 0.0
        %597 = vmatprep.subr.mxu0 0.0
        %598 = vmatpush1.xpose.msra.mxu0 0.0
        %599 = vmatprep.subr.mxu0 0.0
        %600 = vmatpush1.xpose.msra.mxu0 0.0
        %601 = vmatprep.mubr.f32.mxu0 0.0
        %602 = vmatmul.mubr.f32.gmra.mrb[0].mxu0 %v533
        %v603 = vpop.f32.mrb[0].mxu0
        %v604 = vadd.f32 %v362, %v603
        %v605 = vpop.f32.mrb[0].mxu0
        %606 = vdwg.mxu0
        %v607 = vsel %vm367, %v604, -inf
        %608 = vmax.xlane.f32.xlu0 %v607
        %v609 = vpop.xlane.xlu0 %608
        %v610 = vsub.f32 %v604, %v609
        %v611 = vmul.f32 %v610, 1.442695
        %v612 = vpow.pop %v611
        %v613 = vsel %vm367, %v612, 0.0
        %614 = vadd.xlane.f32.xlu0 %v613
        %v615 = vpop.xlane.xlu0 %614
        %v616 = vrcp.pop %v615
        %v617 = vmul.f32 %v612, %v616
        %618 = vrot.lane.b32.xlu0 %v354, 56
        %v619 = vpop.permute.xlu0 %618
        %v622 = vsel %vm367, %v617, 0
        %624 = vmatprep.subr.mxu0 0.0
        %625 = vmatpush1.msra.mxu0 %v619
        %626 = vmatprep.subr.mxu0 0.0
        %627 = vmatpush1.msra.mxu0 0.0
        %628 = vmatprep.subr.mxu0 0.0
        %629 = vmatpush1.msra.mxu0 0.0
        %630 = vmatprep.subr.mxu0 0.0
        %631 = vmatpush1.msra.mxu0 0.0
        %632 = vmatprep.subr.mxu0 0.0
        %633 = vmatpush1.msra.mxu0 0.0
        %634 = vmatprep.subr.mxu0 0.0
        %635 = vmatpush1.msra.mxu0 0.0
        %636 = vmatprep.subr.mxu0 0.0
        %637 = vmatpush1.msra.mxu0 0.0
        %638 = vmatprep.subr.mxu0 0.0
        %639 = vmatpush1.msra.mxu0 0.0
        %640 = vmatprep.subr.mxu0 0.0
        %641 = vmatpush1.msra.mxu0 0.0
        %642 = vmatprep.subr.mxu0 0.0
        %643 = vmatpush1.msra.mxu0 0.0
        %644 = vmatprep.subr.mxu0 0.0
        %645 = vmatpush1.msra.mxu0 0.0
        %646 = vmatprep.subr.mxu0 0.0
        %647 = vmatpush1.msra.mxu0 0.0
        %648 = vmatprep.subr.mxu0 0.0
        %649 = vmatpush1.msra.mxu0 0.0
        %650 = vmatprep.subr.mxu0 0.0
        %651 = vmatpush1.msra.mxu0 0.0
        %652 = vmatprep.subr.mxu0 0.0
        %653 = vmatpush1.msra.mxu0 0.0
        %654 = vmatprep.subr.mxu0 0.0
        %655 = vmatpush1.msra.mxu0 0.0
        %656 = vmatprep.subr.mxu0 0.0
        %657 = vmatpush1.msra.mxu0 0.0
        %658 = vmatprep.subr.mxu0 0.0
        %659 = vmatpush1.msra.mxu0 0.0
        %660 = vmatprep.subr.mxu0 0.0
        %661 = vmatpush1.msra.mxu0 0.0
        %662 = vmatprep.subr.mxu0 0.0
        %663 = vmatpush1.msra.mxu0 0.0
        %664 = vmatprep.subr.mxu0 0.0
        %665 = vmatpush1.msra.mxu0 0.0
        %666 = vmatprep.subr.mxu0 0.0
        %667 = vmatpush1.msra.mxu0 0.0
        %668 = vmatprep.subr.mxu0 0.0
        %669 = vmatpush1.msra.mxu0 0.0
        %670 = vmatprep.subr.mxu0 0.0
        %671 = vmatpush1.msra.mxu0 0.0
        %672 = vmatprep.subr.mxu0 0.0
        %673 = vmatpush1.msra.mxu0 0.0
        %674 = vmatprep.subr.mxu0 0.0
        %675 = vmatpush1.msra.mxu0 0.0
        %676 = vmatprep.subr.mxu0 0.0
        %677 = vmatpush1.msra.mxu0 0.0
        %678 = vmatprep.subr.mxu0 0.0
        %679 = vmatpush1.msra.mxu0 0.0
        %680 = vmatprep.subr.mxu0 0.0
        %681 = vmatpush1.msra.mxu0 0.0
        %682 = vmatprep.subr.mxu0 0.0
        %683 = vmatpush1.msra.mxu0 0.0
        %684 = vmatprep.subr.mxu0 0.0
        %685 = vmatpush1.msra.mxu0 0.0
        %686 = vmatprep.subr.mxu0 0.0
        %687 = vmatpush1.msra.mxu0 0.0
        %688 = vmatprep.mubr.f32.mxu0 0.0
        %689 = vmatmul.mubr.f32.gmra.mrb[0].mxu0 %v622
        %v690 = vpop.f32.mrb[0].mxu0
        %v691 = vadd.f32 0.0, %v690
        %v692 = vpop.f32.mrb[0].mxu0
        %693 = vdwg.mxu0
        %694 = vrot.lane.b32.xlu0 %v354, 112
        %v695 = vpop.permute.xlu0 %694
        %696 = vrot.lane.b32.xlu0 %v354, 80
        %v697 = vpop.permute.xlu0 %696
        %v698 = vsel %vm367, %v695, 0
        %v700 = vsel %vm367, %v697, 0
        %702 = vmatprep.subr.mxu0 0.0
        %703 = vmatpush1.xpose.msra.mxu0 %v700
        %704 = vmatprep.subr.mxu0 0.0
        %705 = vmatpush1.xpose.msra.mxu0 0.0
        %706 = vmatprep.subr.mxu0 0.0
        %707 = vmatpush1.xpose.msra.mxu0 0.0
        %708 = vmatprep.subr.mxu0 0.0
        %709 = vmatpush1.xpose.msra.mxu0 0.0
        %710 = vmatprep.subr.mxu0 0.0
        %711 = vmatpush1.xpose.msra.mxu0 0.0
        %712 = vmatprep.subr.mxu0 0.0
        %713 = vmatpush1.xpose.msra.mxu0 0.0
        %714 = vmatprep.subr.mxu0 0.0
        %715 = vmatpush1.xpose.msra.mxu0 0.0
        %716 = vmatprep.subr.mxu0 0.0
        %717 = vmatpush1.xpose.msra.mxu0 0.0
        %718 = vmatprep.subr.mxu0 0.0
        %719 = vmatpush1.xpose.msra.mxu0 0.0
        %720 = vmatprep.subr.mxu0 0.0
        %721 = vmatpush1.xpose.msra.mxu0 0.0
        %722 = vmatprep.subr.mxu0 0.0
        %723 = vmatpush1.xpose.msra.mxu0 0.0
        %724 = vmatprep.subr.mxu0 0.0
        %725 = vmatpush1.xpose.msra.mxu0 0.0
        %726 = vmatprep.subr.mxu0 0.0
        %727 = vmatpush1.xpose.msra.mxu0 0.0
        %728 = vmatprep.subr.mxu0 0.0
        %729 = vmatpush1.xpose.msra.mxu0 0.0
        %730 = vmatprep.subr.mxu0 0.0
        %731 = vmatpush1.xpose.msra.mxu0 0.0
        %732 = vmatprep.subr.mxu0 0.0
        %733 = vmatpush1.xpose.msra.mxu0 0.0
        %734 = vmatprep.subr.mxu0 0.0
        %735 = vmatpush1.xpose.msra.mxu0 0.0
        %736 = vmatprep.subr.mxu0 0.0
        %737 = vmatpush1.xpose.msra.mxu0 0.0
        %738 = vmatprep.subr.mxu0 0.0
        %739 = vmatpush1.xpose.msra.mxu0 0.0
        %740 = vmatprep.subr.mxu0 0.0
        %741 = vmatpush1.xpose.msra.mxu0 0.0
        %742 = vmatprep.subr.mxu0 0.0
        %743 = vmatpush1.xpose.msra.mxu0 0.0
        %744 = vmatprep.subr.mxu0 0.0
        %745 = vmatpush1.xpose.msra.mxu0 0.0
        %746 = vmatprep.subr.mxu0 0.0
        %747 = vmatpush1.xpose.msra.mxu0 0.0
        %748 = vmatprep.subr.mxu0 0.0
        %749 = vmatpush1.xpose.msra.mxu0 0.0
        %750 = vmatprep.subr.mxu0 0.0
        %751 = vmatpush1.xpose.msra.mxu0 0.0
        %752 = vmatprep.subr.mxu0 0.0
        %753 = vmatpush1.xpose.msra.mxu0 0.0
        %754 = vmatprep.subr.mxu0 0.0
        %755 = vmatpush1.xpose.msra.mxu0 0.0
        %756 = vmatprep.subr.mxu0 0.0
        %757 = vmatpush1.xpose.msra.mxu0 0.0
        %758 = vmatprep.subr.mxu0 0.0
        %759 = vmatpush1.xpose.msra.mxu0 0.0
        %760 = vmatprep.subr.mxu0 0.0
        %761 = vmatpush1.xpose.msra.mxu0 0.0
        %762 = vmatprep.subr.mxu0 0.0
        %763 = vmatpush1.xpose.msra.mxu0 0.0
        %764 = vmatprep.subr.mxu0 0.0
        %765 = vmatpush1.xpose.msra.mxu0 0.0
        %766 = vmatprep.mubr.f32.mxu0 0.0
        %767 = vmatmul.mubr.f32.gmra.mrb[0].mxu0 %v698
        %v768 = vpop.f32.mrb[0].mxu0
        %v769 = vadd.f32 %v362, %v768
        %v770 = vpop.f32.mrb[0].mxu0
        %771 = vdwg.mxu0
        %v772 = vsel %vm367, %v769, -inf
        %773 = vmax.xlane.f32.xlu0 %v772
        %v774 = vpop.xlane.xlu0 %773
        %v775 = vsub.f32 %v769, %v774
        %v776 = vmul.f32 %v775, 1.442695
        %v777 = vpow.pop %v776
        %v778 = vsel %vm367, %v777, 0.0
        %779 = vadd.xlane.f32.xlu0 %v778
        %v780 = vpop.xlane.xlu0 %779
        %v781 = vrcp.pop %v780
        %v782 = vmul.f32 %v777, %v781
        %783 = vrot.lane.b32.xlu0 %v354, 48
        %v784 = vpop.permute.xlu0 %783
        %v787 = vsel %vm367, %v782, 0
        %789 = vmatprep.subr.mxu0 0.0
        %790 = vmatpush1.msra.mxu0 %v784
        %791 = vmatprep.subr.mxu0 0.0
        %792 = vmatpush1.msra.mxu0 0.0
        %793 = vmatprep.subr.mxu0 0.0
        %794 = vmatpush1.msra.mxu0 0.0
        %795 = vmatprep.subr.mxu0 0.0
        %796 = vmatpush1.msra.mxu0 0.0
        %797 = vmatprep.subr.mxu0 0.0
        %798 = vmatpush1.msra.mxu0 0.0
        %799 = vmatprep.subr.mxu0 0.0
        %800 = vmatpush1.msra.mxu0 0.0
        %801 = vmatprep.subr.mxu0 0.0
        %802 = vmatpush1.msra.mxu0 0.0
        %803 = vmatprep.subr.mxu0 0.0
        %804 = vmatpush1.msra.mxu0 0.0
        %805 = vmatprep.subr.mxu0 0.0
        %806 = vmatpush1.msra.mxu0 0.0
        %807 = vmatprep.subr.mxu0 0.0
        %808 = vmatpush1.msra.mxu0 0.0
        %809 = vmatprep.subr.mxu0 0.0
        %810 = vmatpush1.msra.mxu0 0.0
        %811 = vmatprep.subr.mxu0 0.0
        %812 = vmatpush1.msra.mxu0 0.0
        %813 = vmatprep.subr.mxu0 0.0
        %814 = vmatpush1.msra.mxu0 0.0
        %815 = vmatprep.subr.mxu0 0.0
        %816 = vmatpush1.msra.mxu0 0.0
        %817 = vmatprep.subr.mxu0 0.0
        %818 = vmatpush1.msra.mxu0 0.0
        %819 = vmatprep.subr.mxu0 0.0
        %820 = vmatpush1.msra.mxu0 0.0
        %821 = vmatprep.subr.mxu0 0.0
        %822 = vmatpush1.msra.mxu0 0.0
        %823 = vmatprep.subr.mxu0 0.0
        %824 = vmatpush1.msra.mxu0 0.0
        %825 = vmatprep.subr.mxu0 0.0
        %826 = vmatpush1.msra.mxu0 0.0
        %827 = vmatprep.subr.mxu0 0.0
        %828 = vmatpush1.msra.mxu0 0.0
        %829 = vmatprep.subr.mxu0 0.0
        %830 = vmatpush1.msra.mxu0 0.0
        %831 = vmatprep.subr.mxu0 0.0
        %832 = vmatpush1.msra.mxu0 0.0
        %833 = vmatprep.subr.mxu0 0.0
        %834 = vmatpush1.msra.mxu0 0.0
        %835 = vmatprep.subr.mxu0 0.0
        %836 = vmatpush1.msra.mxu0 0.0
        %837 = vmatprep.subr.mxu0 0.0
        %838 = vmatpush1.msra.mxu0 0.0
        %839 = vmatprep.subr.mxu0 0.0
        %840 = vmatpush1.msra.mxu0 0.0
        %841 = vmatprep.subr.mxu0 0.0
        %842 = vmatpush1.msra.mxu0 0.0
        %843 = vmatprep.subr.mxu0 0.0
        %844 = vmatpush1.msra.mxu0 0.0
        %845 = vmatprep.subr.mxu0 0.0
        %846 = vmatpush1.msra.mxu0 0.0
        %847 = vmatprep.subr.mxu0 0.0
        %848 = vmatpush1.msra.mxu0 0.0
        %849 = vmatprep.subr.mxu0 0.0
        %850 = vmatpush1.msra.mxu0 0.0
        %851 = vmatprep.subr.mxu0 0.0
        %852 = vmatpush1.msra.mxu0 0.0
        %853 = vmatprep.mubr.f32.mxu0 0.0
        %854 = vmatmul.mubr.f32.gmra.mrb[0].mxu0 %v787
        %v855 = vpop.f32.mrb[0].mxu0
        %v856 = vadd.f32 0.0, %v855
        %v857 = vpop.f32.mrb[0].mxu0
        %858 = vdwg.mxu0
        %859 = vrot.lane.b32.xlu0 %v354, 104
        %v860 = vpop.permute.xlu0 %859
        %861 = vrot.lane.b32.xlu0 %v354, 72
        %v862 = vpop.permute.xlu0 %861
        %v863 = vsel %vm367, %v860, 0
        %v865 = vsel %vm367, %v862, 0
        %867 = vmatprep.subr.mxu0 0.0
        %868 = vmatpush1.xpose.msra.mxu0 %v865
        %869 = vmatprep.subr.mxu0 0.0
        %870 = vmatpush1.xpose.msra.mxu0 0.0
        %871 = vmatprep.subr.mxu0 0.0
        %872 = vmatpush1.xpose.msra.mxu0 0.0
        %873 = vmatprep.subr.mxu0 0.0
        %874 = vmatpush1.xpose.msra.mxu0 0.0
        %875 = vmatprep.subr.mxu0 0.0
        %876 = vmatpush1.xpose.msra.mxu0 0.0
        %877 = vmatprep.subr.mxu0 0.0
        %878 = vmatpush1.xpose.msra.mxu0 0.0
        %879 = vmatprep.subr.mxu0 0.0
        %880 = vmatpush1.xpose.msra.mxu0 0.0
        %881 = vmatprep.subr.mxu0 0.0
        %882 = vmatpush1.xpose.msra.mxu0 0.0
        %883 = vmatprep.subr.mxu0 0.0
        %884 = vmatpush1.xpose.msra.mxu0 0.0
        %885 = vmatprep.subr.mxu0 0.0
        %886 = vmatpush1.xpose.msra.mxu0 0.0
        %887 = vmatprep.subr.mxu0 0.0
        %888 = vmatpush1.xpose.msra.mxu0 0.0
        %889 = vmatprep.subr.mxu0 0.0
        %890 = vmatpush1.xpose.msra.mxu0 0.0
        %891 = vmatprep.subr.mxu0 0.0
        %892 = vmatpush1.xpose.msra.mxu0 0.0
        %893 = vmatprep.subr.mxu0 0.0
        %894 = vmatpush1.xpose.msra.mxu0 0.0
        %895 = vmatprep.subr.mxu0 0.0
        %896 = vmatpush1.xpose.msra.mxu0 0.0
        %897 = vmatprep.subr.mxu0 0.0
        %898 = vmatpush1.xpose.msra.mxu0 0.0
        %899 = vmatprep.subr.mxu0 0.0
        %900 = vmatpush1.xpose.msra.mxu0 0.0
        %901 = vmatprep.subr.mxu0 0.0
        %902 = vmatpush1.xpose.msra.mxu0 0.0
        %903 = vmatprep.subr.mxu0 0.0
        %904 = vmatpush1.xpose.msra.mxu0 0.0
        %905 = vmatprep.subr.mxu0 0.0
        %906 = vmatpush1.xpose.msra.mxu0 0.0
        %907 = vmatprep.subr.mxu0 0.0
        %908 = vmatpush1.xpose.msra.mxu0 0.0
        %909 = vmatprep.subr.mxu0 0.0
        %910 = vmatpush1.xpose.msra.mxu0 0.0
        %911 = vmatprep.subr.mxu0 0.0
        %912 = vmatpush1.xpose.msra.mxu0 0.0
        %913 = vmatprep.subr.mxu0 0.0
        %914 = vmatpush1.xpose.msra.mxu0 0.0
        %915 = vmatprep.subr.mxu0 0.0
        %916 = vmatpush1.xpose.msra.mxu0 0.0
        %917 = vmatprep.subr.mxu0 0.0
        %918 = vmatpush1.xpose.msra.mxu0 0.0
        %919 = vmatprep.subr.mxu0 0.0
        %920 = vmatpush1.xpose.msra.mxu0 0.0
        %921 = vmatprep.subr.mxu0 0.0
        %922 = vmatpush1.xpose.msra.mxu0 0.0
        %923 = vmatprep.subr.mxu0 0.0
        %924 = vmatpush1.xpose.msra.mxu0 0.0
        %925 = vmatprep.subr.mxu0 0.0
        %926 = vmatpush1.xpose.msra.mxu0 0.0
        %927 = vmatprep.subr.mxu0 0.0
        %928 = vmatpush1.xpose.msra.mxu0 0.0
        %929 = vmatprep.subr.mxu0 0.0
        %930 = vmatpush1.xpose.msra.mxu0 0.0
        %931 = vmatprep.mubr.f32.mxu0 0.0
        %932 = vmatmul.mubr.f32.gmra.mrb[0].mxu0 %v863
        %v933 = vpop.f32.mrb[0].mxu0
        %v934 = vadd.f32 %v362, %v933
        %v935 = vpop.f32.mrb[0].mxu0
        %936 = vdwg.mxu0
        %v937 = vsel %vm367, %v934, -inf
        %938 = vmax.xlane.f32.xlu0 %v937
        %v939 = vpop.xlane.xlu0 %938
        %v940 = vsub.f32 %v934, %v939
        %v941 = vmul.f32 %v940, 1.442695
        %v942 = vpow.pop %v941
        %v943 = vsel %vm367, %v942, 0.0
        %944 = vadd.xlane.f32.xlu0 %v943
        %v945 = vpop.xlane.xlu0 %944
        %v946 = vrcp.pop %v945
        %v947 = vmul.f32 %v942, %v946
        %948 = vrot.lane.b32.xlu0 %v354, 40
        %v949 = vpop.permute.xlu0 %948
        %v952 = vsel %vm367, %v947, 0
        %954 = vmatprep.subr.mxu0 0.0
        %955 = vmatpush1.msra.mxu0 %v949
        %956 = vmatprep.subr.mxu0 0.0
        %957 = vmatpush1.msra.mxu0 0.0
        %958 = vmatprep.subr.mxu0 0.0
        %959 = vmatpush1.msra.mxu0 0.0
        %960 = vmatprep.subr.mxu0 0.0
        %961 = vmatpush1.msra.mxu0 0.0
        %962 = vmatprep.subr.mxu0 0.0
        %963 = vmatpush1.msra.mxu0 0.0
        %964 = vmatprep.subr.mxu0 0.0
        %965 = vmatpush1.msra.mxu0 0.0
        %966 = vmatprep.subr.mxu0 0.0
        %967 = vmatpush1.msra.mxu0 0.0
        %968 = vmatprep.subr.mxu0 0.0
        %969 = vmatpush1.msra.mxu0 0.0
        %970 = vmatprep.subr.mxu0 0.0
        %971 = vmatpush1.msra.mxu0 0.0
        %972 = vmatprep.subr.mxu0 0.0
        %973 = vmatpush1.msra.mxu0 0.0
        %974 = vmatprep.subr.mxu0 0.0
        %975 = vmatpush1.msra.mxu0 0.0
        %976 = vmatprep.subr.mxu0 0.0
        %977 = vmatpush1.msra.mxu0 0.0
        %978 = vmatprep.subr.mxu0 0.0
        %979 = vmatpush1.msra.mxu0 0.0
        %980 = vmatprep.subr.mxu0 0.0
        %981 = vmatpush1.msra.mxu0 0.0
        %982 = vmatprep.subr.mxu0 0.0
        %983 = vmatpush1.msra.mxu0 0.0
        %984 = vmatprep.subr.mxu0 0.0
        %985 = vmatpush1.msra.mxu0 0.0
        %986 = vmatprep.subr.mxu0 0.0
        %987 = vmatpush1.msra.mxu0 0.0
        %988 = vmatprep.subr.mxu0 0.0
        %989 = vmatpush1.msra.mxu0 0.0
        %990 = vmatprep.subr.mxu0 0.0
        %991 = vmatpush1.msra.mxu0 0.0
        %992 = vmatprep.subr.mxu0 0.0
        %993 = vmatpush1.msra.mxu0 0.0
        %994 = vmatprep.subr.mxu0 0.0
        %995 = vmatpush1.msra.mxu0 0.0
        %996 = vmatprep.subr.mxu0 0.0
        %997 = vmatpush1.msra.mxu0 0.0
        %998 = vmatprep.subr.mxu0 0.0
        %999 = vmatpush1.msra.mxu0 0.0
        %1000 = vmatprep.subr.mxu0 0.0
        %1001 = vmatpush1.msra.mxu0 0.0
        %1002 = vmatprep.subr.mxu0 0.0
        %1003 = vmatpush1.msra.mxu0 0.0
        %1004 = vmatprep.subr.mxu0 0.0
        %1005 = vmatpush1.msra.mxu0 0.0
        %1006 = vmatprep.subr.mxu0 0.0
        %1007 = vmatpush1.msra.mxu0 0.0
        %1008 = vmatprep.subr.mxu0 0.0
        %1009 = vmatpush1.msra.mxu0 0.0
        %1010 = vmatprep.subr.mxu0 0.0
        %1011 = vmatpush1.msra.mxu0 0.0
        %1012 = vmatprep.subr.mxu0 0.0
        %1013 = vmatpush1.msra.mxu0 0.0
        %1014 = vmatprep.subr.mxu0 0.0
        %1015 = vmatpush1.msra.mxu0 0.0
        %1016 = vmatprep.subr.mxu0 0.0
        %1017 = vmatpush1.msra.mxu0 0.0
        %1018 = vmatprep.mubr.f32.mxu0 0.0
        %1019 = vmatmul.mubr.f32.gmra.mrb[0].mxu0 %v952
        %v1020 = vpop.f32.mrb[0].mxu0
        %v1021 = vadd.f32 0.0, %v1020
        %v1022 = vpop.f32.mrb[0].mxu0
        %1023 = vdwg.mxu0
        %1025 = vrot.lane.b32.xlu0 %v691, 8
        %v1026 = vpop.permute.xlu0 %1025
        %1029 = vrot.lane.b32.xlu0 %v856, 16
        %v1030 = vpop.permute.xlu0 %1029
        %1033 = vrot.lane.b32.xlu0 %v1021, 24
        %v1034 = vpop.permute.xlu0 %1033
        %v1036 = vsel %vm367, %v526, %v1026
        %vm1037 = vcmask 130048
        %v1038 = vsel %vm1037, %v1036, %v1030
        %vm1039 = vcmask 195584
        %v1040 = vsel %vm1039, %v1038, %v1034
        %v1041 = vld [vmem:[%s2] sm:$0xff]
        %v1042 = vld [vmem:[%s2 + $0x8] sm:$0xff]
        %v1043 = vld [vmem:[%s2 + $0x10] sm:$0xff]
        %v1044 = vld [vmem:[%s2 + $0x18] sm:$0xff]
        %v1045 = vlaneseq
        %v1046 = vshrl.u32 %v1045, 7
        %v1047 = vsub.s32 0, %v1046
        %v1048 = vrot.slane %v239, %v1047
        %1053 = vrot.lane.b32.xlu0 %v1041, 32
        %v1054 = vpop.permute.xlu0 %1053
        %1055 = vrot.lane.b32.xlu0 %v1042, 32
        %v1056 = vpop.permute.xlu0 %1055
        %1057 = vrot.lane.b32.xlu0 %v1043, 32
        %v1058 = vpop.permute.xlu0 %1057
        %1059 = vrot.lane.b32.xlu0 %v1044, 32
        %v1060 = vpop.permute.xlu0 %1059
        %v1066 = vsel %vm243, %v1040, 0
        %1068 = vmatprep.subr.mxu0 0.0
        %1069 = vmatpush1.msra.mxu0 %v1054
        %1070 = vmatprep.subr.mxu0 0.0
        %1071 = vmatpush1.msra.mxu0 %v1056
        %1072 = vmatprep.subr.mxu0 0.0
        %1073 = vmatpush1.msra.mxu0 %v1058
        %1074 = vmatprep.subr.mxu0 0.0
        %1075 = vmatpush1.msra.mxu0 %v1060
        %1076 = vmatprep.subr.mxu0 0.0
        %1077 = vmatpush1.msra.mxu0 0.0
        %1078 = vmatprep.subr.mxu0 0.0
        %1079 = vmatpush1.msra.mxu0 0.0
        %1080 = vmatprep.subr.mxu0 0.0
        %1081 = vmatpush1.msra.mxu0 0.0
        %1082 = vmatprep.subr.mxu0 0.0
        %1083 = vmatpush1.msra.mxu0 0.0
        %1084 = vmatprep.subr.mxu0 0.0
        %1085 = vmatpush1.msra.mxu0 0.0
        %1086 = vmatprep.subr.mxu0 0.0
        %1087 = vmatpush1.msra.mxu0 0.0
        %1088 = vmatprep.subr.mxu0 0.0
        %1089 = vmatpush1.msra.mxu0 0.0
        %1090 = vmatprep.subr.mxu0 0.0
        %1091 = vmatpush1.msra.mxu0 0.0
        %1092 = vmatprep.subr.mxu0 0.0
        %1093 = vmatpush1.msra.mxu0 0.0
        %1094 = vmatprep.subr.mxu0 0.0
        %1095 = vmatpush1.msra.mxu0 0.0
        %1096 = vmatprep.subr.mxu0 0.0
        %1097 = vmatpush1.msra.mxu0 0.0
        %1098 = vmatprep.subr.mxu0 0.0
        %1099 = vmatpush1.msra.mxu0 0.0
        %1100 = vmatprep.subr.mxu0 0.0
        %1101 = vmatpush1.msra.mxu0 0.0
        %1102 = vmatprep.subr.mxu0 0.0
        %1103 = vmatpush1.msra.mxu0 0.0
        %1104 = vmatprep.subr.mxu0 0.0
        %1105 = vmatpush1.msra.mxu0 0.0
        %1106 = vmatprep.subr.mxu0 0.0
        %1107 = vmatpush1.msra.mxu0 0.0
        %1108 = vmatprep.subr.mxu0 0.0
        %1109 = vmatpush1.msra.mxu0 0.0
        %1110 = vmatprep.subr.mxu0 0.0
        %1111 = vmatpush1.msra.mxu0 0.0
        %1112 = vmatprep.subr.mxu0 0.0
        %1113 = vmatpush1.msra.mxu0 0.0
        %1114 = vmatprep.subr.mxu0 0.0
        %1115 = vmatpush1.msra.mxu0 0.0
        %1116 = vmatprep.subr.mxu0 0.0
        %1117 = vmatpush1.msra.mxu0 0.0
        %1118 = vmatprep.subr.mxu0 0.0
        %1119 = vmatpush1.msra.mxu0 0.0
        %1120 = vmatprep.subr.mxu0 0.0
        %1121 = vmatpush1.msra.mxu0 0.0
        %1122 = vmatprep.subr.mxu0 0.0
        %1123 = vmatpush1.msra.mxu0 0.0
        %1124 = vmatprep.subr.mxu0 0.0
        %1125 = vmatpush1.msra.mxu0 0.0
        %1126 = vmatprep.subr.mxu0 0.0
        %1127 = vmatpush1.msra.mxu0 0.0
        %1128 = vmatprep.subr.mxu0 0.0
        %1129 = vmatpush1.msra.mxu0 0.0
        %1130 = vmatprep.subr.mxu0 0.0
        %1131 = vmatpush1.msra.mxu0 0.0
        %1132 = vmatprep.mubr.f32.mxu0 0.0
        %1133 = vmatmul.mubr.f32.gmra.mrb[0].mxu0 %v1066
        %v1134 = vpop.f32.mrb[0].mxu0
        %v1135 = vadd.f32 %v1048, %v1134
        %v1136 = vpop.f32.mrb[0].mxu0
        %1137 = vdwg.mxu0
        %v1138 = vadd.f32 %v234, %v1135
        %v1139 = vsel %vm243, %v1138, 0.0
        %1140 = vadd.xlane.f32.xlu0 %v1139
        %v1141 = vpop.xlane.xlu0 %1140
        %v1142 = vmul.f32 %v1141, %v247
        %v1143 = vsub.f32 %v1138, %v1142
        %v1144 = vmul.f32 %v1143, %v1143
        %v1145 = vsel %vm243, %v1144, 0.0
        %1146 = vadd.xlane.f32.xlu0 %v1145
        %v1147 = vpop.xlane.xlu0 %1146
        %v1148 = vmul.f32 %v1147, %v254
        %v1149 = vrsqrt.pop %v1148
        %v1150 = vmul.f32 %v1148, %v1149
        %vm1151 = vcmp.eq.f32.partialorder %v1148, inf
        %v1152 = vsel %vm1151, %v1148, %v1150
        %vm1153 = vcmp.eq.f32.partialorder %v1148, 0.0
        %v1154 = vand.u32 %v1148, 2147483648
        %v1155 = vsel %vm1153, %v1154, %v1152
        %v1156 = vadd.f32 %v1155, 1e-06
        %v1157 = vrcp.pop %v1156
        %v1158 = vlaneseq
        %v1159 = vshrl.u32 %v1158, 7
        %v1160 = vsub.s32 0, %v1159
        %v1161 = vrot.slane %v237, %v1160
        %v1162 = vmul.f32 %v1161, %v1143
        %v1163 = vmul.f32 %v1162, %v1157
        %v1164 = vlaneseq
        %v1165 = vshrl.u32 %v1164, 7
        %v1166 = vsub.s32 0, %v1165
        %v1167 = vrot.slane %v238, %v1166
        %v1168 = vadd.f32 %v1163, %v1167
        %v1169 = vld [vmem:[%s3] sm:$0xff]
        %v1170 = vld [vmem:[%s3 + $0x8] sm:$0xff]
        %v1171 = vld [vmem:[%s3 + $0x10] sm:$0xff]
        %v1172 = vld [vmem:[%s3 + $0x18] sm:$0xff]
        %v1173 = vlaneseq
        %v1174 = vshrl.u32 %v1173, 7
        %v1175 = vsub.s32 0, %v1174
        %v1176 = vrot.slane %v242, %v1175
        %v1178 = vsel %vm243, %v1168, 0
        %1180 = vmatprep.subr.mxu0 0.0
        %1181 = vmatpush1.msra.mxu0 %v1169
        %1182 = vmatprep.subr.mxu0 0.0
        %1183 = vmatpush1.msra.mxu0 %v1170
        %1184 = vmatprep.subr.mxu0 0.0
        %1185 = vmatpush1.msra.mxu0 %v1171
        %1186 = vmatprep.subr.mxu0 0.0
        %1187 = vmatpush1.msra.mxu0 %v1172
        %1188 = vmatprep.subr.mxu0 0.0
        %1189 = vmatpush1.msra.mxu0 0.0
        %1190 = vmatprep.subr.mxu0 0.0
        %1191 = vmatpush1.msra.mxu0 0.0
        %1192 = vmatprep.subr.mxu0 0.0
        %1193 = vmatpush1.msra.mxu0 0.0
        %1194 = vmatprep.subr.mxu0 0.0
        %1195 = vmatpush1.msra.mxu0 0.0
        %1196 = vmatprep.subr.mxu0 0.0
        %1197 = vmatpush1.msra.mxu0 0.0
        %1198 = vmatprep.subr.mxu0 0.0
        %1199 = vmatpush1.msra.mxu0 0.0
        %1200 = vmatprep.subr.mxu0 0.0
        %1201 = vmatpush1.msra.mxu0 0.0
        %1202 = vmatprep.subr.mxu0 0.0
        %1203 = vmatpush1.msra.mxu0 0.0
        %1204 = vmatprep.subr.mxu0 0.0
        %1205 = vmatpush1.msra.mxu0 0.0
        %1206 = vmatprep.subr.mxu0 0.0
        %1207 = vmatpush1.msra.mxu0 0.0
        %1208 = vmatprep.subr.mxu0 0.0
        %1209 = vmatpush1.msra.mxu0 0.0
        %1210 = vmatprep.subr.mxu0 0.0
        %1211 = vmatpush1.msra.mxu0 0.0
        %1212 = vmatprep.subr.mxu0 0.0
        %1213 = vmatpush1.msra.mxu0 0.0
        %1214 = vmatprep.subr.mxu0 0.0
        %1215 = vmatpush1.msra.mxu0 0.0
        %1216 = vmatprep.subr.mxu0 0.0
        %1217 = vmatpush1.msra.mxu0 0.0
        %1218 = vmatprep.subr.mxu0 0.0
        %1219 = vmatpush1.msra.mxu0 0.0
        %1220 = vmatprep.subr.mxu0 0.0
        %1221 = vmatpush1.msra.mxu0 0.0
        %1222 = vmatprep.subr.mxu0 0.0
        %1223 = vmatpush1.msra.mxu0 0.0
        %1224 = vmatprep.subr.mxu0 0.0
        %1225 = vmatpush1.msra.mxu0 0.0
        %1226 = vmatprep.subr.mxu0 0.0
        %1227 = vmatpush1.msra.mxu0 0.0
        %1228 = vmatprep.subr.mxu0 0.0
        %1229 = vmatpush1.msra.mxu0 0.0
        %1230 = vmatprep.subr.mxu0 0.0
        %1231 = vmatpush1.msra.mxu0 0.0
        %1232 = vmatprep.subr.mxu0 0.0
        %1233 = vmatpush1.msra.mxu0 0.0
        %1234 = vmatprep.subr.mxu0 0.0
        %1235 = vmatpush1.msra.mxu0 0.0
        %1236 = vmatprep.subr.mxu0 0.0
        %1237 = vmatpush1.msra.mxu0 0.0
        %1238 = vmatprep.subr.mxu0 0.0
        %1239 = vmatpush1.msra.mxu0 0.0
        %1240 = vmatprep.subr.mxu0 0.0
        %1241 = vmatpush1.msra.mxu0 0.0
        %1242 = vmatprep.subr.mxu0 0.0
        %1243 = vmatpush1.msra.mxu0 0.0
        %1244 = vmatprep.mubr.f32.mxu0 0.0
        %1245 = vmatmul.mubr.f32.gmra.mrb[0].mxu0 %v1178
        %v1246 = vpop.f32.mrb[0].mxu0
        %v1247 = vadd.f32 %v1176, %v1246
        %v1248 = vpop.f32.mrb[0].mxu0
        %1249 = vdwg.mxu0
        %v1250 = vmax.f32 %v1247, 0.0
        %v1251 = vld [vmem:[%s3 + $0x20] sm:$0xff]
        %v1252 = vld [vmem:[%s3 + $0x28] sm:$0xff]
        %v1253 = vld [vmem:[%s3 + $0x30] sm:$0xff]
        %v1254 = vld [vmem:[%s3 + $0x38] sm:$0xff]
        %v1255 = vld [vmem:[%s3 + $0x40] sm:$0xff]
        %v1256 = vld [vmem:[%s3 + $0x48] sm:$0xff]
        %v1257 = vld [vmem:[%s3 + $0x50] sm:$0xff]
        %v1258 = vld [vmem:[%s3 + $0x58] sm:$0xff]
        %v1259 = vlaneseq
        %v1260 = vshrl.u32 %v1259, 7
        %v1261 = vsub.s32 0, %v1260
        %v1262 = vrot.slane %v240, %v1261
        %vm1263 = vcmask 523264
        %v1265 = vsel %vm1263, %v1250, 0
        %1267 = vmatprep.subr.mxu0 0.0
        %1268 = vmatpush1.msra.mxu0 %v1251
        %1269 = vmatprep.subr.mxu0 0.0
        %1270 = vmatpush1.msra.mxu0 %v1252
        %1271 = vmatprep.subr.mxu0 0.0
        %1272 = vmatpush1.msra.mxu0 %v1253
        %1273 = vmatprep.subr.mxu0 0.0
        %1274 = vmatpush1.msra.mxu0 %v1254
        %1275 = vmatprep.subr.mxu0 0.0
        %1276 = vmatpush1.msra.mxu0 %v1255
        %1277 = vmatprep.subr.mxu0 0.0
        %1278 = vmatpush1.msra.mxu0 %v1256
        %1279 = vmatprep.subr.mxu0 0.0
        %1280 = vmatpush1.msra.mxu0 %v1257
        %1281 = vmatprep.subr.mxu0 0.0
        %1282 = vmatpush1.msra.mxu0 %v1258
        %1283 = vmatprep.subr.mxu0 0.0
        %1284 = vmatpush1.msra.mxu0 0.0
        %1285 = vmatprep.subr.mxu0 0.0
        %1286 = vmatpush1.msra.mxu0 0.0
        %1287 = vmatprep.subr.mxu0 0.0
        %1288 = vmatpush1.msra.mxu0 0.0
        %1289 = vmatprep.subr.mxu0 0.0
        %1290 = vmatpush1.msra.mxu0 0.0
        %1291 = vmatprep.subr.mxu0 0.0
        %1292 = vmatpush1.msra.mxu0 0.0
        %1293 = vmatprep.subr.mxu0 0.0
        %1294 = vmatpush1.msra.mxu0 0.0
        %1295 = vmatprep.subr.mxu0 0.0
        %1296 = vmatpush1.msra.mxu0 0.0
        %1297 = vmatprep.subr.mxu0 0.0
        %1298 = vmatpush1.msra.mxu0 0.0
        %1299 = vmatprep.subr.mxu0 0.0
        %1300 = vmatpush1.msra.mxu0 0.0
        %1301 = vmatprep.subr.mxu0 0.0
        %1302 = vmatpush1.msra.mxu0 0.0
        %1303 = vmatprep.subr.mxu0 0.0
        %1304 = vmatpush1.msra.mxu0 0.0
        %1305 = vmatprep.subr.mxu0 0.0
        %1306 = vmatpush1.msra.mxu0 0.0
        %1307 = vmatprep.subr.mxu0 0.0
        %1308 = vmatpush1.msra.mxu0 0.0
        %1309 = vmatprep.subr.mxu0 0.0
        %1310 = vmatpush1.msra.mxu0 0.0
        %1311 = vmatprep.subr.mxu0 0.0
        %1312 = vmatpush1.msra.mxu0 0.0
        %1313 = vmatprep.subr.mxu0 0.0
        %1314 = vmatpush1.msra.mxu0 0.0
        %1315 = vmatprep.subr.mxu0 0.0
        %1316 = vmatpush1.msra.mxu0 0.0
        %1317 = vmatprep.subr.mxu0 0.0
        %1318 = vmatpush1.msra.mxu0 0.0
        %1319 = vmatprep.subr.mxu0 0.0
        %1320 = vmatpush1.msra.mxu0 0.0
        %1321 = vmatprep.subr.mxu0 0.0
        %1322 = vmatpush1.msra.mxu0 0.0
        %1323 = vmatprep.subr.mxu0 0.0
        %1324 = vmatpush1.msra.mxu0 0.0
        %1325 = vmatprep.subr.mxu0 0.0
        %1326 = vmatpush1.msra.mxu0 0.0
        %1327 = vmatprep.subr.mxu0 0.0
        %1328 = vmatpush1.msra.mxu0 0.0
        %1329 = vmatprep.subr.mxu0 0.0
        %1330 = vmatpush1.msra.mxu0 0.0
        %1331 = vmatprep.mubr.f32.mxu0 0.0
        %1332 = vmatmul.mubr.f32.gmra.mrb[0].mxu0 %v1265
        %v1333 = vpop.f32.mrb[0].mxu0
        %v1334 = vadd.f32 %v1262, %v1333
        %v1335 = vpop.f32.mrb[0].mxu0
        %1336 = vdwg.mxu0
        %v1337 = vadd.f32 %v1138, %v1334
        %1338 = vst.msk [vmem:[%s226] sm:$0xff] %vm243, %v1337
        %s1339 = sand.u32 %s142, 1
        %s1340 = scalar_lea.sflag [#allocation3], %s1339
        %s1341 = sand.u32 %s142, 1
        %s1342 = smul.addr %s1341, 8
        %s1343 = scalar_lea.vmem [#allocation2], %s1342
        // Predicated region
        $region41: #{encoder_layer.1} parent=39 // pred_check
          %p1344 = pneg %p152
        $region42: #{encoder_layer.1} parent=39 // pred_check_branch
          %1346 = sbr.rel (%p1344) target = $region44
        $region43: #{encoder_layer.1} parent=39 // pred_region
          %s1348 = ssub.s32 128, 128
          %1349 = vsyncadd %s1340, %s1348
          %s1350 = smul.addr %s19, 128
          %s1351 = scalar_lea.hbm %s5, %s1350
          %s1353 = sshll.u32 %s1343, 4
          %s1354 = int_to_ptr.vmem [resolvable:$true] %s1353
          %1356 = dma.vmem_to_hbm [thread:$0]  %s1354, 128, %s1351, %s1340
        $region44: #{encoder_layer.1} parent=39 // pred_fallthru
          _
      $region40: #{encoder_layer.1} parent=5 // pred_fallthru
        _
      %p1357 = scmp.le.s32.totalorder 2, %s14
      // Predicated region
      $region45: #{encoder_layer.1} parent=5 // pred_check
        %p1358 = pneg %p1357
      $region46: #{encoder_layer.1} parent=5 // pred_check_branch
        %1360 = sbr.rel (%p1358) target = $region48
      $region47: #{encoder_layer.1} parent=5 // pred_region
        %s1361 = ssub.s32 %s14, 2
        // Predicated region
        $region49: #{encoder_layer.1} parent=47 // pred_check
          %p1362 = pneg %p158
        $region50: #{encoder_layer.1} parent=47 // pred_check_branch
          %1364 = sbr.rel (%p1362) target = $region52
        $region51: #{encoder_layer.1} parent=47 // pred_region
          %s1365 = sand.u32 %s143, 1
          %s1366 = scalar_lea.sflag [#allocation3], %s1365
          %s1367 = sand.u32 %s143, 1
          %s1368 = smul.addr %s1367, 8
          %s1369 = scalar_lea.vmem [#allocation2], %s1368
          %1370 = dma.done %s1366, 128
        $region52: #{encoder_layer.1} parent=47 // pred_fallthru
          _
      $region48: #{encoder_layer.1} parent=5 // pred_fallthru
        _
    $region6: #{encoder_layer.1} parent=1 // loop_footer
      %s18 = sadd.s32 1, %s14
    $region7: #{encoder_layer.1} parent=1 // loop_footer_branch
      %13 = sbr.rel target = $region3
    $region8: #{encoder_layer.1} parent=1 // loop_exit
      _
    %1371 = vsyncpa [#allocation3], 1
    %s1372 = scalar_lea.sflag [#allocation3], 1
    %1373 = vsyncpa %s1372, 1

</llo_original>
